<compile_context>
chip_gen: v6e
topology: v6e:2x2x1
jax: 0.10.0
libtpu: 0.0.40
codegen_flags: <defaults>
</compile_context>

<pallas_src>
import functools

import jax
import jax.numpy as jnp
from jax.experimental import pallas as pl
from jax.experimental.pallas import tpu as pltpu

# ------------------------------ packed layout ----------------------------------
# encoder weight slab (128, 512) bf16 : [We1 | We2 | We3(cols shifted by 21)]
# decoder weight slab (640, 128) bf16 : [Wd1(256 rows) ; Wd2 ; Wd3 ; Wd4]
# bias slab (1, 1536) f32 : be1|be2|be3(shifted)|bd1|bd2|bd3|bd4|B_row|valid_mask
GLANES = 256          # compact glist layout: x in lanes 0..20, encoded in 21..149
N_VALID = 150.0


# ----------------------------- in-kernel helpers --------------------------------

def _lin(h_f32, w_bf16, b_f32, act=None):
    """y = h @ W + b with bf16 MXU operands and f32 accumulation/activation."""
    y = jnp.dot(h_f32.astype(jnp.bfloat16), w_bf16,
                preferred_element_type=jnp.float32) + b_f32
    if act == "relu":
        y = jnp.maximum(y, 0.0)
    elif act == "sigmoid":
        y = jax.nn.sigmoid(y)
    return y


def _encoder_g(x, wenc_ref, bias_ref):
    """Return glist in the compact 256-lane layout (x | encoded | zeros)."""
    h = _lin(x, wenc_ref[:, 0:128], bias_ref[:, 0:128], "relu")        # (tb, 128)
    h = _lin(h, wenc_ref[:, 128:256], bias_ref[:, 128:256], "relu")    # (tb, 128)
    e = _lin(h, wenc_ref[:, 256:512], bias_ref[:, 256:512], None)      # (tb, 256), enc @ lanes 21..149
    # x occupies lanes 0..20 (We3/be3 columns there are zero), 128-aligned concat.
    return jnp.concatenate([x, jnp.zeros_like(x)], axis=-1) + e        # (tb, 256)


def _decoder(g, wdec_ref, bias_ref):
    h = _lin(g, wdec_ref[0:256, :], bias_ref[:, 512:640], "relu")
    h = _lin(h, wdec_ref[256:384, :], bias_ref[:, 640:768], "relu")
    h = _lin(h, wdec_ref[384:512, :], bias_ref[:, 768:896], "relu")
    return _lin(h, wdec_ref[512:640, :], bias_ref[:, 896:1024], "sigmoid")   # (tb, 128)


# ---------------------------------- kernels -------------------------------------

def recon_kernel(x_ref, wenc_ref, wdec_ref, bias_ref, out_ref):
    """flag=False path: decoded = decoder(cat(x, encoder(x)))."""
    g = _encoder_g(x_ref[...], wenc_ref, bias_ref)
    out_ref[...] = _decoder(g, wdec_ref, bias_ref)


def predict_kernel(x_ref, u_ref, wenc_ref, wdec_ref, bias_ref, a_ref, out_ref):
    """flag=True path: linear-dynamics step + matrix loss + decoder.

    Output slab (tb, 128): decoded in lanes 0..20, per-sample Matrix_Loss in lane 127.
    """
    x = x_ref[...]                               # (tb, 128) f32
    u = u_ref[...]                               # (tb, 1)   f32
    g = _encoder_g(x, wenc_ref, bias_ref)        # (tb, 256) f32

    b_row = bias_ref[:, 1024:1280]               # (1, 256) f32, B in lanes 0..149
    mask = bias_ref[:, 1280:1536]                # (1, 256) f32, 1.0 in lanes 0..149

    # ylist = glist @ A + u @ B   (A kept in f32 for loss accuracy; zero pad is free)
    y = jnp.dot(g, a_ref[...], preferred_element_type=jnp.float32) + u * b_row

    # Matrix_Loss = sqrt(mean((glist + u - ylist)^2)) over the 150 valid lanes.
    diff = (g + u - y) * mask                    # explicit mask: robust to pad contents
    loss = jnp.sqrt(jnp.sum(diff * diff, axis=1, keepdims=True) * (1.0 / N_VALID))

    dec = _decoder(y, wdec_ref, bias_ref)        # (tb, 128)
    lane = jax.lax.broadcasted_iota(jnp.int32, dec.shape, 1)
    out_ref[...] = jnp.where(lane == 127, loss, dec)


# ------------------------ offline parameter preparation --------------------------

def prepare_params(params):
    """Pad / pack / cast the raw parameter dict once, off the per-call hot path."""
    f32, bf16 = jnp.float32, jnp.bfloat16

    def pad2(w, rows, cols, row_off=0, col_off=0):
        out = jnp.zeros((rows, cols), f32)
        return out.at[row_off:row_off + w.shape[0],
                      col_off:col_off + w.shape[1]].set(w.astype(f32))

    def pad_row(b, cols, off=0):
        b = b.reshape(1, -1).astype(f32)
        out = jnp.zeros((1, cols), f32)
        return out.at[:, off:off + b.shape[1]].set(b)

    # encoder slab (128, 512) bf16; We3 columns shifted by 21 into the compact layout
    enc_w = jnp.concatenate([
        pad2(params["we1"], 128, 128),
        pad2(params["we2"], 128, 128),
        pad2(params["we3"], 128, 256, col_off=21),
    ], axis=1).astype(bf16)

    # decoder slab (640, 128) bf16; Wd1 rows 0..149 already match the compact layout
    dec_w = jnp.concatenate([
        pad2(params["wd1"], 256, 128),
        pad2(params["wd2"], 128, 128),
        pad2(params["wd3"], 128, 128),
        pad2(params["wd4"], 128, 128),
    ], axis=0).astype(bf16)

    # bias slab (1, 1536) f32: biases + B row + valid-lane mask (all precomputed here)
    mask = jnp.zeros((1, GLANES), f32).at[:, :150].set(1.0)
    bias = jnp.concatenate([
        pad_row(params["be1"], 128), pad_row(params["be2"], 128),
        pad_row(params["be3"], 256, off=21),
        pad_row(params["bd1"], 128), pad_row(params["bd2"], 128),
        pad_row(params["bd3"], 128), pad_row(params["bd4"], 128),
        pad_row(params["B"], GLANES),
        mask,
    ], axis=1)

    # A (256, 256) f32: kept full precision for the Matrix_Loss path (resident in VMEM)
    a_pad = pad2(params["A"], GLANES, GLANES)

    assert enc_w.shape == (128, 512) and dec_w.shape == (640, 128)
    assert bias.shape == (1, 1536) and a_pad.shape == (GLANES, GLANES)

    return {"enc_w": enc_w, "dec_w": dec_w, "bias": bias, "a_pad": a_pad,
            "A": params["A"], "B": params["B"]}   # originals returned on the flag=True path


# ----------------------------------- wrappers ------------------------------------

def _padded_batch_and_tile(b):
    """Round the batch up to a legal size and pick the per-grid-step row tile."""
    if b <= 128:
        bp = max(8, -(-b // 8) * 8)
        return bp, bp                      # single tile
    bp = -(-b // 128) * 128
    tb = 256 if (bp % 256 == 0 and bp >= 512) else 128   # fill 256x256 MXU when possible
    return bp, tb


@functools.partial(jax.jit, static_argnames=("flag",))
def autoencoder_forward_batched(prep, x, u, flag):
    """x: (B, 21) f32, u: (B,) f32, flag: static python bool."""
    b = x.shape[0]
    bp, tb = _padded_batch_and_tile(b)
    grid = (bp // tb,)

    x_pad = jnp.zeros((bp, 128), jnp.float32).at[:b, :21].set(x.astype(jnp.float32))

    row_spec = pl.BlockSpec((tb, 128), lambda i: (i, 0))

    def const_spec(arr):   # weight slabs: constant block index -> DMA'd once, stays resident
        return pl.BlockSpec(arr.shape, lambda i: (0, 0))

    cparams = pltpu.CompilerParams(dimension_semantics=("parallel",))

    if not flag:
        out = pl.pallas_call(
            recon_kernel,
            out_shape=jax.ShapeDtypeStruct((bp, 128), jnp.float32),
            grid=grid,
            in_specs=[row_spec,
                      const_spec(prep["enc_w"]),
                      const_spec(prep["dec_w"]),
                      const_spec(prep["bias"])],
            out_specs=row_spec,
            compiler_params=cparams,
        )(x_pad, prep["enc_w"], prep["dec_w"], prep["bias"])
        return out[:b, :21]

    u_pad = jnp.zeros((bp, 1), jnp.float32).at[:b, :].set(
        u.astype(jnp.float32).reshape(b, 1))
    out = pl.pallas_call(
        predict_kernel,
        out_shape=jax.ShapeDtypeStruct((bp, 128), jnp.float32),
        grid=grid,
        in_specs=[row_spec,
                  pl.BlockSpec((tb, 1), lambda i: (i, 0)),
                  const_spec(prep["enc_w"]),
                  const_spec(prep["dec_w"]),
                  const_spec(prep["bias"]),
                  const_spec(prep["a_pad"])],
        out_specs=row_spec,
        compiler_params=cparams,
    )(x_pad, u_pad, prep["enc_w"], prep["dec_w"], prep["bias"], prep["a_pad"])
    decoded = out[:b, :21]
    loss = out[:b, 127]
    return decoded, loss, prep["A"], prep["B"]


def autoencoder_forward(prep, x, u, flag):
    """Single-sample API matching AutoEncoder.forward(x, u, flag)."""
    if not flag:
        dec = autoencoder_forward_batched(prep, x.reshape(1, 21), u.reshape(1), False)
        return dec[0]
    dec, loss, A, B = autoencoder_forward_batched(prep, x.reshape(1, 21), u.reshape(1), True)
    return dec[0], loss[0], A, B


# ----------------------------- pure-JAX reference --------------------------------

def reference_forward(params, x, u, flag):
    def lin(h, w, b, act=None):
        y = h @ w + b.reshape(-1)
        if act == "relu":
            y = jnp.maximum(y, 0.0)
        if act == "sigmoid":
            y = jax.nn.sigmoid(y)
        return y

    enc = lin(x, params["we1"], params["be1"], "relu")
    enc = lin(enc, params["we2"], params["be2"], "relu")
    enc = lin(enc, params["we3"], params["be3"], None)
    glist = jnp.concatenate([x, enc], axis=0)                 # (150,)

    def decoder(g):
        h = lin(g, params["wd1"], params["bd1"], "relu")
        h = lin(h, params["wd2"], params["bd2"], "relu")
        h = lin(h, params["wd3"], params["bd3"], "relu")
        return lin(h, params["wd4"], params["bd4"], "sigmoid")

    if flag is False:
        return decoder(glist)

    u_conv = (u.reshape(1, 1) @ params["B"]).reshape(-1)      # (150,)
    alpha = (glist.reshape(1, -1) @ params["A"]).reshape(-1)  # (150,)
    ylist = alpha + u_conv
    base = glist + u
    loss = jnp.sqrt(jnp.mean((base - ylist) ** 2))
    return decoder(ylist), loss, params["A"], params["B"]


# ----------------------------------- params --------------------------------------

def init_params(key):
    ks = jax.random.split(key, 9)

    def dense(k, din, dout, scale):
        kw, kb = jax.random.split(k)
        w = jax.random.normal(kw, (din, dout), jnp.float32) * scale
        b = jax.random.normal(kb, (1, dout), jnp.float32) * scale
        return w, b

    p = {}
    p["we1"], p["be1"] = dense(ks[0], 21, 32, 0.20)
    p["we2"], p["be2"] = dense(ks[1], 32, 64, 0.15)
    p["we3"], p["be3"] = dense(ks[2], 64, 129, 0.10)
    p["wd1"], p["bd1"] = dense(ks[3], 150, 128, 0.08)
    p["wd2"], p["bd2"] = dense(ks[4], 128, 64, 0.08)
    p["wd3"], p["bd3"] = dense(ks[5], 64, 32, 0.10)
    p["wd4"], p["bd4"] = dense(ks[6], 32, 21, 0.15)
    p["A"] = jax.random.normal(ks[7], (150, 150), jnp.float32) * 0.05
    p["B"] = jax.random.normal(ks[8], (1, 150), jnp.float32) * 0.05
    return p


if __name__ == "__main__":
    key = jax.random.PRNGKey(0)
    kp, kx, ku = jax.random.split(key, 3)
    params = init_params(kp)
    prep = prepare_params(params)          # one-time pad/pack/cast (off the hot path)

    B = 256                                # batched M dimension (grid over 128-row tiles)
    xb = jax.random.normal(kx, (B, 21), jnp.float32)
    ub = jax.random.normal(ku, (B,), jnp.float32)

    # flag=False path: batched reconstruction
    dec_recon = jax.block_until_ready(autoencoder_forward_batched(prep, xb, ub, False))

    # flag=True path: batched prediction + per-sample matrix loss
    dec_pred, m_loss, A_out, B_out = autoencoder_forward_batched(prep, xb, ub, True)
    dec_pred = jax.block_until_ready(dec_pred)
    m_loss = jax.block_until_ready(m_loss)

    # single-sample API (original module semantics)
    d1 = jax.block_until_ready(autoencoder_forward(prep, xb[0], ub[0:1], False))
    d1p, l1, _, _ = autoencoder_forward(prep, xb[0], ub[0:1], True)
    d1p = jax.block_until_ready(d1p)
    l1 = jax.block_until_ready(l1)

    # references (tolerance covers bf16 MLP-weight storage + MXU rounding)
    u_dummy = jnp.zeros((B, 1), jnp.float32)
    ref_recon = jax.vmap(lambda x, u: reference_forward(params, x, u, False))(xb, u_dummy)
    ref_pred, ref_loss = jax.vmap(
        lambda x, u: reference_forward(params, x, u, True)[:2])(xb, ub.reshape(B, 1))
    ref1 = reference_forward(params, xb[0], ub[0:1], False)
    ref1p, ref1l, _, _ = reference_forward(params, xb[0], ub[0:1], True)

    assert dec_recon.shape == (B, 21) and dec_pred.shape == (B, 21) and m_loss.shape == (B,)
    assert d1.shape == (21,) and d1p.shape == (21,) and l1.shape == ()
    assert jnp.allclose(dec_recon, ref_recon, atol=3e-2, rtol=3e-2)
    assert jnp.allclose(dec_pred, ref_pred, atol=3e-2, rtol=3e-2)
    assert jnp.allclose(m_loss, ref_loss, atol=3e-2, rtol=3e-2)
    assert jnp.allclose(d1, ref1, atol=3e-2, rtol=3e-2)
    assert jnp.allclose(d1p, ref1p, atol=3e-2, rtol=3e-2)
    assert jnp.allclose(l1, ref1l, atol=3e-2, rtol=3e-2)

    print("KERNEL_OK")
</pallas_src>

<mosaic_0001>
module attributes {stable_mosaic.version = 11 : i64} {
  func.func @recon_kernel(%arg0: i32, %arg1: memref<128x128xf32, #tpu.memory_space<vmem>>, %arg2: memref<128x512xbf16, #tpu.memory_space<vmem>>, %arg3: memref<640x128xbf16, #tpu.memory_space<vmem>>, %arg4: memref<1x1536xf32, #tpu.memory_space<vmem>>, %arg5: memref<128x128xf32, #tpu.memory_space<vmem>>) attributes {dimension_semantics = [#tpu.dimension_semantics<parallel>], iteration_bounds = array<i64: 2>, scalar_prefetch = 0 : i64, scratch_operands = 0 : i64, tpu.core_type = #tpu.core_type<tc>, window_params = [{transform_indices = @transform_0, window_bounds = array<i64: 128, 128>}, {pipeline_mode = #tpu.pipeline_mode<synchronous>, transform_indices = @transform_1, window_bounds = array<i64: 128, 512>}, {pipeline_mode = #tpu.pipeline_mode<synchronous>, transform_indices = @transform_2, window_bounds = array<i64: 640, 128>}, {pipeline_mode = #tpu.pipeline_mode<synchronous>, transform_indices = @transform_3, window_bounds = array<i64: 1, 1536>}, {transform_indices = @transform_4, window_bounds = array<i64: 128, 128>}]} {
    %c0 = arith.constant 0 : index
    %c0_0 = arith.constant 0 : index
    %0 = vector.load %arg1[%c0, %c0_0] : memref<128x128xf32, #tpu.memory_space<vmem>>, vector<128x128xf32>
    %c0_1 = arith.constant 0 : index
    %c0_2 = arith.constant 0 : index
    %1 = vector.load %arg2[%c0_1, %c0_2] : memref<128x512xbf16, #tpu.memory_space<vmem>>, vector<128x128xbf16>
    %c0_3 = arith.constant 0 : index
    %c0_4 = arith.constant 0 : index
    %2 = vector.load %arg4[%c0_3, %c0_4] : memref<1x1536xf32, #tpu.memory_space<vmem>>, vector<1x128xf32>
    %3 = arith.truncf %0 : vector<128x128xf32> to vector<128x128xbf16>
    %cst = arith.constant dense<0.000000e+00> : vector<128x128xf32>
    %4 = tpu.matmul %3, %1, %cst {dimension_numbers = #tpu.dot_dimension_numbers<[1], [0], [0], [1], [0, 0, 1, 1], [], []>} : vector<128x128xbf16>, vector<128x128xbf16>, vector<128x128xf32> -> vector<128x128xf32>
    %5 = vector.broadcast %2 : vector<1x128xf32> to vector<128x128xf32>
    %6 = arith.addf %4, %5 : vector<128x128xf32>
    %cst_5 = arith.constant 0.000000e+00 : f32
    %7 = vector.broadcast %cst_5 : f32 to vector<128x128xf32>
    %8 = arith.maximumf %6, %7 : vector<128x128xf32>
    %c0_6 = arith.constant 0 : index
    %c128 = arith.constant 128 : index
    %9 = vector.load %arg2[%c0_6, %c128] : memref<128x512xbf16, #tpu.memory_space<vmem>>, vector<128x128xbf16>
    %c0_7 = arith.constant 0 : index
    %c128_8 = arith.constant 128 : index
    %10 = vector.load %arg4[%c0_7, %c128_8] : memref<1x1536xf32, #tpu.memory_space<vmem>>, vector<1x128xf32>
    %11 = arith.truncf %8 : vector<128x128xf32> to vector<128x128xbf16>
    %cst_9 = arith.constant dense<0.000000e+00> : vector<128x128xf32>
    %12 = tpu.matmul %11, %9, %cst_9 {dimension_numbers = #tpu.dot_dimension_numbers<[1], [0], [0], [1], [0, 0, 1, 1], [], []>} : vector<128x128xbf16>, vector<128x128xbf16>, vector<128x128xf32> -> vector<128x128xf32>
    %13 = vector.broadcast %10 : vector<1x128xf32> to vector<128x128xf32>
    %14 = arith.addf %12, %13 : vector<128x128xf32>
    %cst_10 = arith.constant 0.000000e+00 : f32
    %15 = vector.broadcast %cst_10 : f32 to vector<128x128xf32>
    %16 = arith.maximumf %14, %15 : vector<128x128xf32>
    %c0_11 = arith.constant 0 : index
    %c256 = arith.constant 256 : index
    %17 = vector.load %arg2[%c0_11, %c256] : memref<128x512xbf16, #tpu.memory_space<vmem>>, vector<128x256xbf16>
    %c0_12 = arith.constant 0 : index
    %c256_13 = arith.constant 256 : index
    %18 = vector.load %arg4[%c0_12, %c256_13] : memref<1x1536xf32, #tpu.memory_space<vmem>>, vector<1x256xf32>
    %19 = arith.truncf %16 : vector<128x128xf32> to vector<128x128xbf16>
    %cst_14 = arith.constant dense<0.000000e+00> : vector<128x256xf32>
    %20 = tpu.matmul %19, %17, %cst_14 {dimension_numbers = #tpu.dot_dimension_numbers<[1], [0], [0], [1], [0, 0, 1, 1], [], []>} : vector<128x128xbf16>, vector<128x256xbf16>, vector<128x256xf32> -> vector<128x256xf32>
    %21 = vector.broadcast %18 : vector<1x256xf32> to vector<128x256xf32>
    %22 = arith.addf %20, %21 : vector<128x256xf32>
    %cst_15 = arith.constant 0.000000e+00 : f32
    %23 = vector.broadcast %cst_15 : f32 to vector<128x128xf32>
    %24 = tpu.concatenate %0, %23 in 1 : vector<128x128xf32>, vector<128x128xf32> -> vector<128x256xf32>
    %25 = arith.addf %24, %22 : vector<128x256xf32>
    %c0_16 = arith.constant 0 : index
    %c0_17 = arith.constant 0 : index
    %26 = vector.load %arg3[%c0_16, %c0_17] : memref<640x128xbf16, #tpu.memory_space<vmem>>, vector<256x128xbf16>
    %c0_18 = arith.constant 0 : index
    %c512 = arith.constant 512 : index
    %27 = vector.load %arg4[%c0_18, %c512] : memref<1x1536xf32, #tpu.memory_space<vmem>>, vector<1x128xf32>
    %28 = arith.truncf %25 : vector<128x256xf32> to vector<128x256xbf16>
    %cst_19 = arith.constant dense<0.000000e+00> : vector<128x128xf32>
    %29 = tpu.matmul %28, %26, %cst_19 {dimension_numbers = #tpu.dot_dimension_numbers<[1], [0], [0], [1], [0, 0, 1, 1], [], []>} : vector<128x256xbf16>, vector<256x128xbf16>, vector<128x128xf32> -> vector<128x128xf32>
    %30 = vector.broadcast %27 : vector<1x128xf32> to vector<128x128xf32>
    %31 = arith.addf %29, %30 : vector<128x128xf32>
    %cst_20 = arith.constant 0.000000e+00 : f32
    %32 = vector.broadcast %cst_20 : f32 to vector<128x128xf32>
    %33 = arith.maximumf %31, %32 : vector<128x128xf32>
    %c256_21 = arith.constant 256 : index
    %c0_22 = arith.constant 0 : index
    %34 = vector.load %arg3[%c256_21, %c0_22] : memref<640x128xbf16, #tpu.memory_space<vmem>>, vector<128x128xbf16>
    %c0_23 = arith.constant 0 : index
    %c640 = arith.constant 640 : index
    %35 = vector.load %arg4[%c0_23, %c640] : memref<1x1536xf32, #tpu.memory_space<vmem>>, vector<1x128xf32>
    %36 = arith.truncf %33 : vector<128x128xf32> to vector<128x128xbf16>
    %cst_24 = arith.constant dense<0.000000e+00> : vector<128x128xf32>
    %37 = tpu.matmul %36, %34, %cst_24 {dimension_numbers = #tpu.dot_dimension_numbers<[1], [0], [0], [1], [0, 0, 1, 1], [], []>} : vector<128x128xbf16>, vector<128x128xbf16>, vector<128x128xf32> -> vector<128x128xf32>
    %38 = vector.broadcast %35 : vector<1x128xf32> to vector<128x128xf32>
    %39 = arith.addf %37, %38 : vector<128x128xf32>
    %cst_25 = arith.constant 0.000000e+00 : f32
    %40 = vector.broadcast %cst_25 : f32 to vector<128x128xf32>
    %41 = arith.maximumf %39, %40 : vector<128x128xf32>
    %c384 = arith.constant 384 : index
    %c0_26 = arith.constant 0 : index
    %42 = vector.load %arg3[%c384, %c0_26] : memref<640x128xbf16, #tpu.memory_space<vmem>>, vector<128x128xbf16>
    %c0_27 = arith.constant 0 : index
    %c768 = arith.constant 768 : index
    %43 = vector.load %arg4[%c0_27, %c768] : memref<1x1536xf32, #tpu.memory_space<vmem>>, vector<1x128xf32>
    %44 = arith.truncf %41 : vector<128x128xf32> to vector<128x128xbf16>
    %cst_28 = arith.constant dense<0.000000e+00> : vector<128x128xf32>
    %45 = tpu.matmul %44, %42, %cst_28 {dimension_numbers = #tpu.dot_dimension_numbers<[1], [0], [0], [1], [0, 0, 1, 1], [], []>} : vector<128x128xbf16>, vector<128x128xbf16>, vector<128x128xf32> -> vector<128x128xf32>
    %46 = vector.broadcast %43 : vector<1x128xf32> to vector<128x128xf32>
    %47 = arith.addf %45, %46 : vector<128x128xf32>
    %cst_29 = arith.constant 0.000000e+00 : f32
    %48 = vector.broadcast %cst_29 : f32 to vector<128x128xf32>
    %49 = arith.maximumf %47, %48 : vector<128x128xf32>
    %c512_30 = arith.constant 512 : index
    %c0_31 = arith.constant 0 : index
    %50 = vector.load %arg3[%c512_30, %c0_31] : memref<640x128xbf16, #tpu.memory_space<vmem>>, vector<128x128xbf16>
    %c0_32 = arith.constant 0 : index
    %c896 = arith.constant 896 : index
    %51 = vector.load %arg4[%c0_32, %c896] : memref<1x1536xf32, #tpu.memory_space<vmem>>, vector<1x128xf32>
    %52 = arith.truncf %49 : vector<128x128xf32> to vector<128x128xbf16>
    %cst_33 = arith.constant dense<0.000000e+00> : vector<128x128xf32>
    %53 = tpu.matmul %52, %50, %cst_33 {dimension_numbers = #tpu.dot_dimension_numbers<[1], [0], [0], [1], [0, 0, 1, 1], [], []>} : vector<128x128xbf16>, vector<128x128xbf16>, vector<128x128xf32> -> vector<128x128xf32>
    %54 = vector.broadcast %51 : vector<1x128xf32> to vector<128x128xf32>
    %55 = arith.addf %53, %54 : vector<128x128xf32>
    %56 = arith.negf %55 : vector<128x128xf32>
    %57 = math.exp %56 : vector<128x128xf32>
    %cst_34 = arith.constant 1.000000e+00 : f32
    %58 = vector.broadcast %cst_34 : f32 to vector<128x128xf32>
    %59 = arith.addf %58, %57 : vector<128x128xf32>
    %60 = arith.divf %58, %59 : vector<128x128xf32>
    %c0_35 = arith.constant 0 : index
    %c0_36 = arith.constant 0 : index
    %61 = vector.load %arg5[%c0_35, %c0_36] : memref<128x128xf32, #tpu.memory_space<vmem>>, vector<128x128xf32>
    tpu.vector_store %arg5[%c0_35, %c0_36], %60 {strides = array<i32>} : memref<128x128xf32, #tpu.memory_space<vmem>>, vector<128x128xf32>,
    return
  }
  func.func @transform_0(%arg0: i32) -> (i32, i32) {
    %c0_i32 = arith.constant 0 : i32
    %c0_i32_0 = arith.constant 0 : i32
    return %arg0, %c0_i32 : i32, i32
  }
  func.func @transform_1(%arg0: i32) -> (i32, i32) {
    %c0_i32 = arith.constant 0 : i32
    %c0_i32_0 = arith.constant 0 : i32
    %c0_i32_1 = arith.constant 0 : i32
    return %c0_i32, %c0_i32_0 : i32, i32
  }
  func.func @transform_2(%arg0: i32) -> (i32, i32) {
    %c0_i32 = arith.constant 0 : i32
    %c0_i32_0 = arith.constant 0 : i32
    %c0_i32_1 = arith.constant 0 : i32
    return %c0_i32, %c0_i32_0 : i32, i32
  }
  func.func @transform_3(%arg0: i32) -> (i32, i32) {
    %c0_i32 = arith.constant 0 : i32
    %c0_i32_0 = arith.constant 0 : i32
    %c0_i32_1 = arith.constant 0 : i32
    return %c0_i32, %c0_i32_0 : i32, i32
  }
  func.func @transform_4(%arg0: i32) -> (i32, i32) {
    %c0_i32 = arith.constant 0 : i32
    %c0_i32_0 = arith.constant 0 : i32
    return %arg0, %c0_i32 : i32, i32
  }
}

</mosaic_0001>

<llo_original>
// kernel: autoencoder_forward_batched.1
$region0: #{autoencoder_forward_batched.1}
  #allocation0 [shape = 'u32[]', space=smem, size = 0x4, offset = 0x4, fixed_abs, tag = 'smem constant byte address 0x4 - core index']
  #allocation1 [shape = 'u32[144,128]{1,0:T(1,128)}', space=vmem, size = 0x12000, scoped, tag = 'internal scratch']
  %s0 = inlined_call_operand.vmem [shape: f32[256,128], index: 0, kind: input, shape index: {}]
  %s1 = inlined_call_operand.vmem [shape: bf16[128,512], index: 1, kind: input, shape index: {}]
  %s2 = inlined_call_operand.vmem [shape: bf16[640,128], index: 2, kind: input, shape index: {}]
  %s3 = inlined_call_operand.vmem [shape: f32[1,1536], index: 3, kind: input, shape index: {}]
  %s4 = inlined_call_operand.vmem [shape: f32[256,128], index: 4, kind: output, shape index: {}]
  %s5 = sld [smem:[#allocation0]]
  $region49: #{autoencoder_forward_batched.1} parent=0
    _
  %s7 = ssub.s32 1, %s5
  %s8 = scalar_select 0, %s7, %s5
  loop: start=0, step=1, limit=4
  $region2: #{autoencoder_forward_batched.1} parent=0 // loop_pre_header
    _
  $region3: #{autoencoder_forward_batched.1} parent=0 // loop_header
    %s10 = sphi 0, %s14
    %p11 = scmp.ge.s32.totalorder %s10, 4
    %s20 = sphi 0, %s22
    %s23 = sphi 0, %s20
    %s24 = sphi 0, %s23
    %s40 = sphi 0, %s24
    %s44 = sphi 0, %s44
    %s46 = sphi 0, %s44
    %s47 = sphi 0, %s46
    %s61 = sphi 0, %s47
    %s65 = sphi 0, %s65
    %s67 = sphi 0, %s65
    %s68 = sphi 0, %s67
    %s82 = sphi 0, %s68
    %s86 = sphi 0, %s86
    %s88 = sphi 0, %s86
    %s89 = sphi 0, %s88
    %s103 = sphi 0, %s89
    %s109 = sphi 0, %s111
    %s112 = sphi 0, %s109
    %s113 = sphi 0, %s112
    %s129 = sphi 0, %s113
  $region4: #{autoencoder_forward_batched.1} parent=0 // loop_header_branch
    %13 = sbr.rel (%p11) target = $region8
  $region5: #{autoencoder_forward_batched.1} parent=0 // loop_body
    %s15 = ssub.s32 %s10, 1
    %s16 = ssub.s32 %s10, 2
    %s17 = sadd.s32 %s10, 1
    %s18 = ssub.s32 %s10, %s17
    %p19 = scmp.eq.s32.totalorder %s18, 0
    %s21 = sadd.s32 %s20, 1
    %s22 = scalar_select %p19, %s20, %s21
    %p25 = pneg %p19
    %p26 = scmp.eq.s32.totalorder %s10, 1
    %p27 = por %p25, %p26
    %p28 = scmp.ne.s32.totalorder %s20, %s23
    %p29 = scmp.eq.s32.totalorder %s10, 0
    %p30 = por %p28, %p29
    %p31 = scmp.ne.s32.totalorder %s20, %s23
    %p32 = scmp.eq.s32.totalorder %s15, 1
    %p33 = por %p31, %p32
    %p34 = scmp.ne.s32.totalorder %s23, %s24
    %p35 = scmp.eq.s32.totalorder %s15, 0
    %p36 = por %p34, %p35
    %p37 = scmp.ne.s32.totalorder %s23, %s24
    %p38 = scmp.eq.s32.totalorder %s16, 1
    %p39 = por %p37, %p38
    %p41 = scmp.ne.s32.totalorder %s24, %s40
    %p42 = scmp.eq.s32.totalorder %s16, 0
    %p43 = por %p41, %p42
    %s45 = sadd.s32 %s44, 1
    %p48 = scmp.eq.s32.totalorder %s10, 1
    %p49 = scmp.ne.s32.totalorder %s44, %s46
    %p50 = scmp.eq.s32.totalorder %s10, 0
    %p51 = por %p49, %p50
    %p52 = scmp.ne.s32.totalorder %s44, %s46
    %p53 = scmp.eq.s32.totalorder %s15, 1
    %p54 = por %p52, %p53
    %p55 = scmp.ne.s32.totalorder %s46, %s47
    %p56 = scmp.eq.s32.totalorder %s15, 0
    %p57 = por %p55, %p56
    %p58 = scmp.ne.s32.totalorder %s46, %s47
    %p59 = scmp.eq.s32.totalorder %s16, 1
    %p60 = por %p58, %p59
    %p62 = scmp.ne.s32.totalorder %s47, %s61
    %p63 = scmp.eq.s32.totalorder %s16, 0
    %p64 = por %p62, %p63
    %s66 = sadd.s32 %s65, 1
    %p69 = scmp.eq.s32.totalorder %s10, 1
    %p70 = scmp.ne.s32.totalorder %s65, %s67
    %p71 = scmp.eq.s32.totalorder %s10, 0
    %p72 = por %p70, %p71
    %p73 = scmp.ne.s32.totalorder %s65, %s67
    %p74 = scmp.eq.s32.totalorder %s15, 1
    %p75 = por %p73, %p74
    %p76 = scmp.ne.s32.totalorder %s67, %s68
    %p77 = scmp.eq.s32.totalorder %s15, 0
    %p78 = por %p76, %p77
    %p79 = scmp.ne.s32.totalorder %s67, %s68
    %p80 = scmp.eq.s32.totalorder %s16, 1
    %p81 = por %p79, %p80
    %p83 = scmp.ne.s32.totalorder %s68, %s82
    %p84 = scmp.eq.s32.totalorder %s16, 0
    %p85 = por %p83, %p84
    %s87 = sadd.s32 %s86, 1
    %p90 = scmp.eq.s32.totalorder %s10, 1
    %p91 = scmp.ne.s32.totalorder %s86, %s88
    %p92 = scmp.eq.s32.totalorder %s10, 0
    %p93 = por %p91, %p92
    %p94 = scmp.ne.s32.totalorder %s86, %s88
    %p95 = scmp.eq.s32.totalorder %s15, 1
    %p96 = por %p94, %p95
    %p97 = scmp.ne.s32.totalorder %s88, %s89
    %p98 = scmp.eq.s32.totalorder %s15, 0
    %p99 = por %p97, %p98
    %p100 = scmp.ne.s32.totalorder %s88, %s89
    %p101 = scmp.eq.s32.totalorder %s16, 1
    %p102 = por %p100, %p101
    %p104 = scmp.ne.s32.totalorder %s89, %s103
    %p105 = scmp.eq.s32.totalorder %s16, 0
    %p106 = por %p104, %p105
    %s107 = ssub.s32 %s10, %s17
    %p108 = scmp.eq.s32.totalorder %s107, 0
    %s110 = sadd.s32 %s109, 1
    %s111 = scalar_select %p108, %s109, %s110
    %p114 = pneg %p108
    %p115 = scmp.eq.s32.totalorder %s10, 1
    %p116 = por %p114, %p115
    %p117 = scmp.ne.s32.totalorder %s109, %s112
    %p118 = scmp.eq.s32.totalorder %s10, 0
    %p119 = por %p117, %p118
    %p120 = scmp.ne.s32.totalorder %s109, %s112
    %p121 = scmp.eq.s32.totalorder %s15, 1
    %p122 = por %p120, %p121
    %p123 = scmp.ne.s32.totalorder %s112, %s113
    %p124 = scmp.eq.s32.totalorder %s15, 0
    %p125 = por %p123, %p124
    %p126 = scmp.ne.s32.totalorder %s112, %s113
    %p127 = scmp.eq.s32.totalorder %s16, 1
    %p128 = por %p126, %p127
    %p130 = scmp.ne.s32.totalorder %s113, %s129
    %p131 = scmp.eq.s32.totalorder %s16, 0
    %p132 = por %p130, %p131
    %p133 = scmp.le.s32.totalorder 1, %s10
    %p134 = scmp.lt.s32.totalorder %s10, 3
    %p135 = pnand %p133, %p134
    %p136 = pneg %p135
    // Predicated region
    $region9: #{autoencoder_forward_batched.1} parent=5 // pred_check
      _
    $region10: #{autoencoder_forward_batched.1} parent=5 // pred_check_branch
      %138 = sbr.rel (%p135) target = $region12
    $region11: #{autoencoder_forward_batched.1} parent=5 // pred_region
      %s139 = ssub.s32 %s10, 1
      // Predicated region
      $region13: #{autoencoder_forward_batched.1} parent=11 // pred_check
        %p140 = pneg %p57
      $region14: #{autoencoder_forward_batched.1} parent=11 // pred_check_branch
        %142 = sbr.rel (%p140) target = $region16
      $region15: #{autoencoder_forward_batched.1} parent=11 // pred_region
        _
      $region16: #{autoencoder_forward_batched.1} parent=11 // pred_fallthru
        _
      // Predicated region
      $region17: #{autoencoder_forward_batched.1} parent=11 // pred_check
        %p143 = pneg %p78
      $region18: #{autoencoder_forward_batched.1} parent=11 // pred_check_branch
        %145 = sbr.rel (%p143) target = $region20
      $region19: #{autoencoder_forward_batched.1} parent=11 // pred_region
        _
      $region20: #{autoencoder_forward_batched.1} parent=11 // pred_fallthru
        _
      // Predicated region
      $region21: #{autoencoder_forward_batched.1} parent=11 // pred_check
        %p146 = pneg %p99
      $region22: #{autoencoder_forward_batched.1} parent=11 // pred_check_branch
        %148 = sbr.rel (%p146) target = $region24
      $region23: #{autoencoder_forward_batched.1} parent=11 // pred_region
        _
      $region24: #{autoencoder_forward_batched.1} parent=11 // pred_fallthru
        _
    $region12: #{autoencoder_forward_batched.1} parent=5 // pred_fallthru
      _
    %p149 = scmp.lt.s32.totalorder %s10, 2
    // Predicated region
    $region25: #{autoencoder_forward_batched.1} parent=5 // pred_check
      %p150 = pneg %p149
    $region26: #{autoencoder_forward_batched.1} parent=5 // pred_check_branch
      %152 = sbr.rel (%p150) target = $region28
    $region27: #{autoencoder_forward_batched.1} parent=5 // pred_region
      // Predicated region
      $region29: #{autoencoder_forward_batched.1} parent=27 // pred_check
        %p153 = pneg %p30
      $region30: #{autoencoder_forward_batched.1} parent=27 // pred_check_branch
        %155 = sbr.rel (%p153) target = $region32
      $region31: #{autoencoder_forward_batched.1} parent=27 // pred_region
        %s156 = smul.u32 16, %s10
        %p157 = scmp.lt.s32.totalorder %s156, 31
        %s158 = scalar_select %p157, %s156, 31
        %s159 = smul.addr %s158, 8
        %s160 = scalar_lea.vmem %s0, %s159
        %s161 = smul.u32 16, %s10
      $region32: #{autoencoder_forward_batched.1} parent=27 // pred_fallthru
        _
    $region28: #{autoencoder_forward_batched.1} parent=5 // pred_fallthru
      _
    %p162 = scmp.le.s32.totalorder 1, %s10
    %p163 = scmp.lt.s32.totalorder %s10, 3
    %p164 = pnand %p162, %p163
    %p165 = pneg %p164
    // Predicated region
    $region33: #{autoencoder_forward_batched.1} parent=5 // pred_check
      _
    $region34: #{autoencoder_forward_batched.1} parent=5 // pred_check_branch
      %167 = sbr.rel (%p164) target = $region36
    $region35: #{autoencoder_forward_batched.1} parent=5 // pred_region
      %s168 = ssub.s32 %s10, 1
      %s169 = smul.u32 16, %s15
      %p170 = scmp.lt.s32.totalorder %s169, 31
      %s171 = scalar_select %p170, %s169, 31
      %s172 = smul.addr %s171, 8
      %s173 = scalar_lea.vmem %s0, %s172
      %p174 = pneg %p36
      %p175 = pneg %p33
      %p176 = pneg %p57
      %p177 = pneg %p54
      %p178 = pneg %p78
      %p179 = pneg %p75
      %p180 = pneg %p99
      %p181 = pneg %p96
      %p182 = pneg %p125
      %p183 = pneg %p122
      %s184 = smul.u32 16, %s15
      %p185 = scmp.lt.s32.totalorder %s184, 31
      %s186 = scalar_select %p185, %s184, 31
      %s187 = smul.addr %s186, 8
      %s188 = scalar_lea.vmem %s4, %s187
      %s189 = smul.u32 16, %s15
      %p190 = scmp.lt.s32.totalorder %s189, 31
      %s191 = scalar_select %p190, %s189, 31
      %s192 = smul.addr %s191, 8
      %s193 = scalar_lea.vmem %s0, %s192
      %s194 = smul.u32 16, %s15
      %s195 = smul.u32 16, %s15
      %p196 = scmp.lt.s32.totalorder %s195, 31
      %s197 = scalar_select %p196, %s195, 31
      %s198 = smul.addr %s197, 8
      %s199 = scalar_lea.vmem %s4, %s198
      %s200 = smul.u32 16, %s15
      %v202 = vld [vmem:[%s193] sm:$0xff]
      %v203 = vld [vmem:[%s193 + $0x8] sm:$0xff]
      %v204 = vld [vmem:[%s193 + $0x10] sm:$0xff]
      %v205 = vld [vmem:[%s193 + $0x18] sm:$0xff]
      %v206 = vld [vmem:[%s193 + $0x20] sm:$0xff]
      %v207 = vld [vmem:[%s193 + $0x28] sm:$0xff]
      %v208 = vld [vmem:[%s193 + $0x30] sm:$0xff]
      %v209 = vld [vmem:[%s193 + $0x38] sm:$0xff]
      %v210 = vld [vmem:[%s193 + $0x40] sm:$0xff]
      %v211 = vld [vmem:[%s193 + $0x48] sm:$0xff]
      %v212 = vld [vmem:[%s193 + $0x50] sm:$0xff]
      %v213 = vld [vmem:[%s193 + $0x58] sm:$0xff]
      %v214 = vld [vmem:[%s193 + $0x60] sm:$0xff]
      %v215 = vld [vmem:[%s193 + $0x68] sm:$0xff]
      %v216 = vld [vmem:[%s193 + $0x70] sm:$0xff]
      %v217 = vld [vmem:[%s193 + $0x78] sm:$0xff]
      %v218 = vld [vmem:[%s1] sm:$0xf]
      %v219 = vld [vmem:[%s1 + $0x10] sm:$0xf]
      %v220 = vld [vmem:[%s1 + $0x20] sm:$0xf]
      %v221 = vld [vmem:[%s1 + $0x30] sm:$0xf]
      %v222 = vld [vmem:[%s1 + $0x40] sm:$0xf]
      %v223 = vld [vmem:[%s1 + $0x50] sm:$0xf]
      %v224 = vld [vmem:[%s1 + $0x60] sm:$0xf]
      %v225 = vld [vmem:[%s1 + $0x70] sm:$0xf]
      %v226 = vld [vmem:[%s1 + $0x80] sm:$0xf]
      %v227 = vld [vmem:[%s1 + $0x90] sm:$0xf]
      %v228 = vld [vmem:[%s1 + $0xa0] sm:$0xf]
      %v229 = vld [vmem:[%s1 + $0xb0] sm:$0xf]
      %v230 = vld [vmem:[%s1 + $0xc0] sm:$0xf]
      %v231 = vld [vmem:[%s1 + $0xd0] sm:$0xf]
      %v232 = vld [vmem:[%s1 + $0xe0] sm:$0xf]
      %v233 = vld [vmem:[%s1 + $0xf0] sm:$0xf]
      %v234 = vld [vmem:[%s3] sm:$0x1]
      %v235 = vpack.c.bf16 %v203, %v202
      %v236 = vpack.c.bf16 %v205, %v204
      %v237 = vpack.c.bf16 %v207, %v206
      %v238 = vpack.c.bf16 %v209, %v208
      %v239 = vpack.c.bf16 %v211, %v210
      %v240 = vpack.c.bf16 %v213, %v212
      %v241 = vpack.c.bf16 %v215, %v214
      %v242 = vpack.c.bf16 %v217, %v216
      %v244 = vlaneseq
      %v245 = vshrl.u32 %v244, 7
      %v246 = vsub.s32 0, %v245
      %v247 = vrot.slane %v234, %v246
      %v265 = vunpack.c.l.b16 %v218
      %v266 = vunpack.c.l.b16 %v219
      %v267 = vunpack.c.l.b16 %v220
      %v268 = vunpack.c.l.b16 %v221
      %v269 = vunpack.c.l.b16 %v222
      %v270 = vunpack.c.l.b16 %v223
      %v271 = vunpack.c.l.b16 %v224
      %v272 = vunpack.c.l.b16 %v225
      %v273 = vunpack.c.l.b16 %v226
      %v274 = vunpack.c.l.b16 %v227
      %v275 = vunpack.c.l.b16 %v228
      %v276 = vunpack.c.l.b16 %v229
      %v277 = vunpack.c.l.b16 %v230
      %v278 = vunpack.c.l.b16 %v231
      %v279 = vunpack.c.l.b16 %v232
      %v280 = vunpack.c.l.b16 %v233
      %v281 = vpack.c.b16 %v266, %v265
      %v282 = vpack.c.b16 %v268, %v267
      %v283 = vpack.c.b16 %v270, %v269
      %v284 = vpack.c.b16 %v272, %v271
      %v285 = vpack.c.b16 %v274, %v273
      %v286 = vpack.c.b16 %v276, %v275
      %v287 = vpack.c.b16 %v278, %v277
      %v288 = vpack.c.b16 %v280, %v279
      %297 = vmatprep.subr.bf16.mxu0 0
      %298 = vmatpush1.bf16.msra.mxu0 %v288
      %299 = vmatprep.subr.bf16.mxu0 0
      %300 = vmatpush1.bf16.msra.mxu0 %v287
      %301 = vmatprep.subr.bf16.mxu0 0
      %302 = vmatpush1.bf16.msra.mxu0 %v286
      %303 = vmatprep.subr.bf16.mxu0 0
      %304 = vmatpush1.bf16.msra.mxu0 %v285
      %305 = vmatprep.subr.bf16.mxu0 0
      %306 = vmatpush1.bf16.msra.mxu0 %v284
      %307 = vmatprep.subr.bf16.mxu0 0
      %308 = vmatpush1.bf16.msra.mxu0 %v283
      %309 = vmatprep.subr.bf16.mxu0 0
      %310 = vmatpush1.bf16.msra.mxu0 %v282
      %311 = vmatprep.subr.bf16.mxu0 0
      %312 = vmatpush1.bf16.msra.mxu0 %v281
      %313 = vmatprep.subr.bf16.mxu0 0
      %314 = vmatpush2.bf16.msra.mxu0 0
      %315 = vmatprep.subr.bf16.mxu0 0
      %316 = vmatpush2.bf16.msra.mxu0 0
      %317 = vmatprep.subr.bf16.mxu0 0
      %318 = vmatpush2.bf16.msra.mxu0 0
      %319 = vmatprep.subr.bf16.mxu0 0
      %320 = vmatpush2.bf16.msra.mxu0 0
      %321 = vmatprep.subr.bf16.mxu0 0
      %322 = vmatpush2.bf16.msra.mxu0 0
      %323 = vmatprep.subr.bf16.mxu0 0
      %324 = vmatpush2.bf16.msra.mxu0 0
      %325 = vmatprep.subr.bf16.mxu0 0
      %326 = vmatpush2.bf16.msra.mxu0 0
      %327 = vmatprep.subr.bf16.mxu0 0
      %328 = vmatpush2.bf16.msra.mxu0 0
      %329 = vmatprep.mubr.bf16.mxu0 0
      %330 = vmatmul.mubr.bf16.gmra.mxu0 %v235
      %v331 = vpop.f32.mrf.mxu0
      %v332 = vadd.f32 %v247, %v331
      %v333 = vpop.f32.mrf.mxu0
      %v334 = vpop.f32.mrf.mxu0
      %v335 = vadd.f32 %v247, %v334
      %v336 = vpop.f32.mrf.mxu0
      %337 = vmatprep.mubr.bf16.mxu0 0
      %338 = vmatmul.mubr.bf16.gmra.mxu0 %v236
      %v339 = vpop.f32.mrf.mxu0
      %v340 = vadd.f32 %v247, %v339
      %v341 = vpop.f32.mrf.mxu0
      %v342 = vpop.f32.mrf.mxu0
      %v343 = vadd.f32 %v247, %v342
      %v344 = vpop.f32.mrf.mxu0
      %345 = vmatprep.mubr.bf16.mxu0 0
      %346 = vmatmul.mubr.bf16.gmra.mxu0 %v237
      %v347 = vpop.f32.mrf.mxu0
      %v348 = vadd.f32 %v247, %v347
      %v349 = vpop.f32.mrf.mxu0
      %v350 = vpop.f32.mrf.mxu0
      %v351 = vadd.f32 %v247, %v350
      %v352 = vpop.f32.mrf.mxu0
      %353 = vmatprep.mubr.bf16.mxu0 0
      %354 = vmatmul.mubr.bf16.gmra.mxu0 %v238
      %v355 = vpop.f32.mrf.mxu0
      %v356 = vadd.f32 %v247, %v355
      %v357 = vpop.f32.mrf.mxu0
      %v358 = vpop.f32.mrf.mxu0
      %v359 = vadd.f32 %v247, %v358
      %v360 = vpop.f32.mrf.mxu0
      %361 = vmatprep.mubr.bf16.mxu0 0
      %362 = vmatmul.mubr.bf16.gmra.mxu0 %v239
      %v363 = vpop.f32.mrf.mxu0
      %v364 = vadd.f32 %v247, %v363
      %v365 = vpop.f32.mrf.mxu0
      %v366 = vpop.f32.mrf.mxu0
      %v367 = vadd.f32 %v247, %v366
      %v368 = vpop.f32.mrf.mxu0
      %369 = vmatprep.mubr.bf16.mxu0 0
      %370 = vmatmul.mubr.bf16.gmra.mxu0 %v240
      %v371 = vpop.f32.mrf.mxu0
      %v372 = vadd.f32 %v247, %v371
      %v373 = vpop.f32.mrf.mxu0
      %v374 = vpop.f32.mrf.mxu0
      %v375 = vadd.f32 %v247, %v374
      %v376 = vpop.f32.mrf.mxu0
      %377 = vmatprep.mubr.bf16.mxu0 0
      %378 = vmatmul.mubr.bf16.gmra.mxu0 %v241
      %v379 = vpop.f32.mrf.mxu0
      %v380 = vadd.f32 %v247, %v379
      %v381 = vpop.f32.mrf.mxu0
      %v382 = vpop.f32.mrf.mxu0
      %v383 = vadd.f32 %v247, %v382
      %v384 = vpop.f32.mrf.mxu0
      %385 = vmatprep.mubr.bf16.mxu0 0
      %386 = vmatmul.mubr.bf16.gmra.mxu0 %v242
      %v387 = vpop.f32.mrf.mxu0
      %v388 = vadd.f32 %v247, %v387
      %v389 = vpop.f32.mrf.mxu0
      %v390 = vpop.f32.mrf.mxu0
      %v391 = vadd.f32 %v247, %v390
      %v392 = vpop.f32.mrf.mxu0
      %393 = vdwg.mxu0
      %v394 = vmax.f32 %v332, 0.0
      %v395 = vmax.f32 %v335, 0.0
      %v396 = vmax.f32 %v340, 0.0
      %v397 = vmax.f32 %v343, 0.0
      %v398 = vmax.f32 %v348, 0.0
      %v399 = vmax.f32 %v351, 0.0
      %v400 = vmax.f32 %v356, 0.0
      %v401 = vmax.f32 %v359, 0.0
      %v402 = vmax.f32 %v364, 0.0
      %v403 = vmax.f32 %v367, 0.0
      %v404 = vmax.f32 %v372, 0.0
      %v405 = vmax.f32 %v375, 0.0
      %v406 = vmax.f32 %v380, 0.0
      %v407 = vmax.f32 %v383, 0.0
      %v408 = vmax.f32 %v388, 0.0
      %v409 = vmax.f32 %v391, 0.0
      %v410 = vld [vmem:[%s1 + $0x4] sm:$0xf]
      %v411 = vld [vmem:[%s1 + $0x14] sm:$0xf]
      %v412 = vld [vmem:[%s1 + $0x24] sm:$0xf]
      %v413 = vld [vmem:[%s1 + $0x34] sm:$0xf]
      %v414 = vld [vmem:[%s1 + $0x44] sm:$0xf]
      %v415 = vld [vmem:[%s1 + $0x54] sm:$0xf]
      %v416 = vld [vmem:[%s1 + $0x64] sm:$0xf]
      %v417 = vld [vmem:[%s1 + $0x74] sm:$0xf]
      %v418 = vld [vmem:[%s1 + $0x84] sm:$0xf]
      %v419 = vld [vmem:[%s1 + $0x94] sm:$0xf]
      %v420 = vld [vmem:[%s1 + $0xa4] sm:$0xf]
      %v421 = vld [vmem:[%s1 + $0xb4] sm:$0xf]
      %v422 = vld [vmem:[%s1 + $0xc4] sm:$0xf]
      %v423 = vld [vmem:[%s1 + $0xd4] sm:$0xf]
      %v424 = vld [vmem:[%s1 + $0xe4] sm:$0xf]
      %v425 = vld [vmem:[%s1 + $0xf4] sm:$0xf]
      %v426 = vld [vmem:[%s3 + $0x1] sm:$0x1]
      %v427 = vpack.c.bf16 %v395, %v394
      %v428 = vpack.c.bf16 %v397, %v396
      %v429 = vpack.c.bf16 %v399, %v398
      %v430 = vpack.c.bf16 %v401, %v400
      %v431 = vpack.c.bf16 %v403, %v402
      %v432 = vpack.c.bf16 %v405, %v404
      %v433 = vpack.c.bf16 %v407, %v406
      %v434 = vpack.c.bf16 %v409, %v408
      %v436 = vlaneseq
      %v437 = vshrl.u32 %v436, 7
      %v438 = vsub.s32 0, %v437
      %v439 = vrot.slane %v426, %v438
      %v457 = vunpack.c.l.b16 %v410
      %v458 = vunpack.c.l.b16 %v411
      %v459 = vunpack.c.l.b16 %v412
      %v460 = vunpack.c.l.b16 %v413
      %v461 = vunpack.c.l.b16 %v414
      %v462 = vunpack.c.l.b16 %v415
      %v463 = vunpack.c.l.b16 %v416
      %v464 = vunpack.c.l.b16 %v417
      %v465 = vunpack.c.l.b16 %v418
      %v466 = vunpack.c.l.b16 %v419
      %v467 = vunpack.c.l.b16 %v420
      %v468 = vunpack.c.l.b16 %v421
      %v469 = vunpack.c.l.b16 %v422
      %v470 = vunpack.c.l.b16 %v423
      %v471 = vunpack.c.l.b16 %v424
      %v472 = vunpack.c.l.b16 %v425
      %v473 = vpack.c.b16 %v458, %v457
      %v474 = vpack.c.b16 %v460, %v459
      %v475 = vpack.c.b16 %v462, %v461
      %v476 = vpack.c.b16 %v464, %v463
      %v477 = vpack.c.b16 %v466, %v465
      %v478 = vpack.c.b16 %v468, %v467
      %v479 = vpack.c.b16 %v470, %v469
      %v480 = vpack.c.b16 %v472, %v471
      %489 = vmatprep.subr.bf16.mxu0 0
      %490 = vmatpush1.bf16.msra.mxu0 %v480
      %491 = vmatprep.subr.bf16.mxu0 0
      %492 = vmatpush1.bf16.msra.mxu0 %v479
      %493 = vmatprep.subr.bf16.mxu0 0
      %494 = vmatpush1.bf16.msra.mxu0 %v478
      %495 = vmatprep.subr.bf16.mxu0 0
      %496 = vmatpush1.bf16.msra.mxu0 %v477
      %497 = vmatprep.subr.bf16.mxu0 0
      %498 = vmatpush1.bf16.msra.mxu0 %v476
      %499 = vmatprep.subr.bf16.mxu0 0
      %500 = vmatpush1.bf16.msra.mxu0 %v475
      %501 = vmatprep.subr.bf16.mxu0 0
      %502 = vmatpush1.bf16.msra.mxu0 %v474
      %503 = vmatprep.subr.bf16.mxu0 0
      %504 = vmatpush1.bf16.msra.mxu0 %v473
      %505 = vmatprep.subr.bf16.mxu0 0
      %506 = vmatpush2.bf16.msra.mxu0 0
      %507 = vmatprep.subr.bf16.mxu0 0
      %508 = vmatpush2.bf16.msra.mxu0 0
      %509 = vmatprep.subr.bf16.mxu0 0
      %510 = vmatpush2.bf16.msra.mxu0 0
      %511 = vmatprep.subr.bf16.mxu0 0
      %512 = vmatpush2.bf16.msra.mxu0 0
      %513 = vmatprep.subr.bf16.mxu0 0
      %514 = vmatpush2.bf16.msra.mxu0 0
      %515 = vmatprep.subr.bf16.mxu0 0
      %516 = vmatpush2.bf16.msra.mxu0 0
      %517 = vmatprep.subr.bf16.mxu0 0
      %518 = vmatpush2.bf16.msra.mxu0 0
      %519 = vmatprep.subr.bf16.mxu0 0
      %520 = vmatpush2.bf16.msra.mxu0 0
      %521 = vmatprep.mubr.bf16.mxu0 0
      %522 = vmatmul.mubr.bf16.gmra.mxu0 %v427
      %v523 = vpop.f32.mrf.mxu0
      %v524 = vadd.f32 %v439, %v523
      %v525 = vpop.f32.mrf.mxu0
      %v526 = vpop.f32.mrf.mxu0
      %v527 = vadd.f32 %v439, %v526
      %v528 = vpop.f32.mrf.mxu0
      %529 = vmatprep.mubr.bf16.mxu0 0
      %530 = vmatmul.mubr.bf16.gmra.mxu0 %v428
      %v531 = vpop.f32.mrf.mxu0
      %v532 = vadd.f32 %v439, %v531
      %v533 = vpop.f32.mrf.mxu0
      %v534 = vpop.f32.mrf.mxu0
      %v535 = vadd.f32 %v439, %v534
      %v536 = vpop.f32.mrf.mxu0
      %537 = vmatprep.mubr.bf16.mxu0 0
      %538 = vmatmul.mubr.bf16.gmra.mxu0 %v429
      %v539 = vpop.f32.mrf.mxu0
      %v540 = vadd.f32 %v439, %v539
      %v541 = vpop.f32.mrf.mxu0
      %v542 = vpop.f32.mrf.mxu0
      %v543 = vadd.f32 %v439, %v542
      %v544 = vpop.f32.mrf.mxu0
      %545 = vmatprep.mubr.bf16.mxu0 0
      %546 = vmatmul.mubr.bf16.gmra.mxu0 %v430
      %v547 = vpop.f32.mrf.mxu0
      %v548 = vadd.f32 %v439, %v547
      %v549 = vpop.f32.mrf.mxu0
      %v550 = vpop.f32.mrf.mxu0
      %v551 = vadd.f32 %v439, %v550
      %v552 = vpop.f32.mrf.mxu0
      %553 = vmatprep.mubr.bf16.mxu0 0
      %554 = vmatmul.mubr.bf16.gmra.mxu0 %v431
      %v555 = vpop.f32.mrf.mxu0
      %v556 = vadd.f32 %v439, %v555
      %v557 = vpop.f32.mrf.mxu0
      %v558 = vpop.f32.mrf.mxu0
      %v559 = vadd.f32 %v439, %v558
      %v560 = vpop.f32.mrf.mxu0
      %561 = vmatprep.mubr.bf16.mxu0 0
      %562 = vmatmul.mubr.bf16.gmra.mxu0 %v432
      %v563 = vpop.f32.mrf.mxu0
      %v564 = vadd.f32 %v439, %v563
      %v565 = vpop.f32.mrf.mxu0
      %v566 = vpop.f32.mrf.mxu0
      %v567 = vadd.f32 %v439, %v566
      %v568 = vpop.f32.mrf.mxu0
      %569 = vmatprep.mubr.bf16.mxu0 0
      %570 = vmatmul.mubr.bf16.gmra.mxu0 %v433
      %v571 = vpop.f32.mrf.mxu0
      %v572 = vadd.f32 %v439, %v571
      %v573 = vpop.f32.mrf.mxu0
      %v574 = vpop.f32.mrf.mxu0
      %v575 = vadd.f32 %v439, %v574
      %v576 = vpop.f32.mrf.mxu0
      %577 = vmatprep.mubr.bf16.mxu0 0
      %578 = vmatmul.mubr.bf16.gmra.mxu0 %v434
      %v579 = vpop.f32.mrf.mxu0
      %v580 = vadd.f32 %v439, %v579
      %v581 = vpop.f32.mrf.mxu0
      %v582 = vpop.f32.mrf.mxu0
      %v583 = vadd.f32 %v439, %v582
      %v584 = vpop.f32.mrf.mxu0
      %585 = vdwg.mxu0
      %v586 = vmax.f32 %v524, 0.0
      %v587 = vmax.f32 %v527, 0.0
      %v588 = vmax.f32 %v532, 0.0
      %v589 = vmax.f32 %v535, 0.0
      %v590 = vmax.f32 %v540, 0.0
      %v591 = vmax.f32 %v543, 0.0
      %v592 = vmax.f32 %v548, 0.0
      %v593 = vmax.f32 %v551, 0.0
      %v594 = vmax.f32 %v556, 0.0
      %v595 = vmax.f32 %v559, 0.0
      %v596 = vmax.f32 %v564, 0.0
      %v597 = vmax.f32 %v567, 0.0
      %v598 = vmax.f32 %v572, 0.0
      %v599 = vmax.f32 %v575, 0.0
      %v600 = vmax.f32 %v580, 0.0
      %v601 = vmax.f32 %v583, 0.0
      %v602 = vld [vmem:[%s1 + $0x8] sm:$0xff]
      %v603 = vld [vmem:[%s1 + $0x18] sm:$0xff]
      %v604 = vld [vmem:[%s1 + $0x28] sm:$0xff]
      %v605 = vld [vmem:[%s1 + $0x38] sm:$0xff]
      %v606 = vld [vmem:[%s1 + $0x48] sm:$0xff]
      %v607 = vld [vmem:[%s1 + $0x58] sm:$0xff]
      %v608 = vld [vmem:[%s1 + $0x68] sm:$0xff]
      %v609 = vld [vmem:[%s1 + $0x78] sm:$0xff]
      %v610 = vld [vmem:[%s1 + $0x88] sm:$0xff]
      %v611 = vld [vmem:[%s1 + $0x98] sm:$0xff]
      %v612 = vld [vmem:[%s1 + $0xa8] sm:$0xff]
      %v613 = vld [vmem:[%s1 + $0xb8] sm:$0xff]
      %v614 = vld [vmem:[%s1 + $0xc8] sm:$0xff]
      %v615 = vld [vmem:[%s1 + $0xd8] sm:$0xff]
      %v616 = vld [vmem:[%s1 + $0xe8] sm:$0xff]
      %v617 = vld [vmem:[%s1 + $0xf8] sm:$0xff]
      %v618 = vld [vmem:[%s3 + $0x2] sm:$0x3]
      %v619 = vpack.c.bf16 %v587, %v586
      %v620 = vpack.c.bf16 %v589, %v588
      %v621 = vpack.c.bf16 %v591, %v590
      %v622 = vpack.c.bf16 %v593, %v592
      %v623 = vpack.c.bf16 %v595, %v594
      %v624 = vpack.c.bf16 %v597, %v596
      %v625 = vpack.c.bf16 %v599, %v598
      %v626 = vpack.c.bf16 %v601, %v600
      %v628 = vlaneseq
      %v629 = vshrl.u32 %v628, 7
      %v630 = vsub.s32 0, %v629
      %v631 = vrot.slane %v618, %v630
      %v632 = vlaneseq
      %v633 = vshrl.u32 %v632, 7
      %v634 = vsub.s32 1, %v633
      %v635 = vrot.slane %v618, %v634
      %v654 = vunpack.c.l.b16 %v602
      %v655 = vunpack.c.h.b16 %v602
      %v656 = vunpack.c.l.b16 %v603
      %v657 = vunpack.c.h.b16 %v603
      %v658 = vunpack.c.l.b16 %v604
      %v659 = vunpack.c.h.b16 %v604
      %v660 = vunpack.c.l.b16 %v605
      %v661 = vunpack.c.h.b16 %v605
      %v662 = vunpack.c.l.b16 %v606
      %v663 = vunpack.c.h.b16 %v606
      %v664 = vunpack.c.l.b16 %v607
      %v665 = vunpack.c.h.b16 %v607
      %v666 = vunpack.c.l.b16 %v608
      %v667 = vunpack.c.h.b16 %v608
      %v668 = vunpack.c.l.b16 %v609
      %v669 = vunpack.c.h.b16 %v609
      %v670 = vunpack.c.l.b16 %v610
      %v671 = vunpack.c.h.b16 %v610
      %v672 = vunpack.c.l.b16 %v611
      %v673 = vunpack.c.h.b16 %v611
      %v674 = vunpack.c.l.b16 %v612
      %v675 = vunpack.c.h.b16 %v612
      %v676 = vunpack.c.l.b16 %v613
      %v677 = vunpack.c.h.b16 %v613
      %v678 = vunpack.c.l.b16 %v614
      %v679 = vunpack.c.h.b16 %v614
      %v680 = vunpack.c.l.b16 %v615
      %v681 = vunpack.c.h.b16 %v615
      %v682 = vunpack.c.l.b16 %v616
      %v683 = vunpack.c.h.b16 %v616
      %v684 = vunpack.c.l.b16 %v617
      %v685 = vunpack.c.h.b16 %v617
      %v686 = vpack.c.b16 %v656, %v654
      %v687 = vpack.c.b16 %v657, %v655
      %v688 = vpack.c.b16 %v660, %v658
      %v689 = vpack.c.b16 %v661, %v659
      %v690 = vpack.c.b16 %v664, %v662
      %v691 = vpack.c.b16 %v665, %v663
      %v692 = vpack.c.b16 %v668, %v666
      %v693 = vpack.c.b16 %v669, %v667
      %v694 = vpack.c.b16 %v672, %v670
      %v695 = vpack.c.b16 %v673, %v671
      %v696 = vpack.c.b16 %v676, %v674
      %v697 = vpack.c.b16 %v677, %v675
      %v698 = vpack.c.b16 %v680, %v678
      %v699 = vpack.c.b16 %v681, %v679
      %v700 = vpack.c.b16 %v684, %v682
      %v701 = vpack.c.b16 %v685, %v683
      %718 = vmatprep.subr.bf16.mxu0 %v701
      %719 = vmatpush1.bf16.msra.mxu0 %v700
      %720 = vmatprep.subr.bf16.mxu0 %v699
      %721 = vmatpush1.bf16.msra.mxu0 %v698
      %722 = vmatprep.subr.bf16.mxu0 %v697
      %723 = vmatpush1.bf16.msra.mxu0 %v696
      %724 = vmatprep.subr.bf16.mxu0 %v695
      %725 = vmatpush1.bf16.msra.mxu0 %v694
      %726 = vmatprep.subr.bf16.mxu0 %v693
      %727 = vmatpush1.bf16.msra.mxu0 %v692
      %728 = vmatprep.subr.bf16.mxu0 %v691
      %729 = vmatpush1.bf16.msra.mxu0 %v690
      %730 = vmatprep.subr.bf16.mxu0 %v689
      %731 = vmatpush1.bf16.msra.mxu0 %v688
      %732 = vmatprep.subr.bf16.mxu0 %v687
      %733 = vmatpush1.bf16.msra.mxu0 %v686
      %734 = vmatprep.subr.bf16.mxu0 0
      %735 = vmatpush2.bf16.msra.mxu0 0
      %736 = vmatprep.subr.bf16.mxu0 0
      %737 = vmatpush2.bf16.msra.mxu0 0
      %738 = vmatprep.subr.bf16.mxu0 0
      %739 = vmatpush2.bf16.msra.mxu0 0
      %740 = vmatprep.subr.bf16.mxu0 0
      %741 = vmatpush2.bf16.msra.mxu0 0
      %742 = vmatprep.subr.bf16.mxu0 0
      %743 = vmatpush2.bf16.msra.mxu0 0
      %744 = vmatprep.subr.bf16.mxu0 0
      %745 = vmatpush2.bf16.msra.mxu0 0
      %746 = vmatprep.subr.bf16.mxu0 0
      %747 = vmatpush2.bf16.msra.mxu0 0
      %748 = vmatprep.subr.bf16.mxu0 0
      %749 = vmatpush2.bf16.msra.mxu0 0
      %750 = vmatprep.mubr.bf16.mxu0 0
      %751 = vmatmul.mubr.bf16.gmra.mxu0 %v619
      %v752 = vpop.f32.mrf.mxu0
      %v753 = vadd.f32 %v631, %v752
      %v754 = vpop.f32.mrf.mxu0
      %v755 = vadd.f32 %v635, %v754
      %v756 = vpop.f32.mrf.mxu0
      %v757 = vadd.f32 %v631, %v756
      %v758 = vpop.f32.mrf.mxu0
      %v759 = vadd.f32 %v635, %v758
      %760 = vmatprep.mubr.bf16.mxu0 0
      %761 = vmatmul.mubr.bf16.gmra.mxu0 %v620
      %v762 = vpop.f32.mrf.mxu0
      %v763 = vadd.f32 %v631, %v762
      %v764 = vpop.f32.mrf.mxu0
      %v765 = vadd.f32 %v635, %v764
      %v766 = vpop.f32.mrf.mxu0
      %v767 = vadd.f32 %v631, %v766
      %v768 = vpop.f32.mrf.mxu0
      %v769 = vadd.f32 %v635, %v768
      %770 = vmatprep.mubr.bf16.mxu0 0
      %771 = vmatmul.mubr.bf16.gmra.mxu0 %v621
      %v772 = vpop.f32.mrf.mxu0
      %v773 = vadd.f32 %v631, %v772
      %v774 = vpop.f32.mrf.mxu0
      %v775 = vadd.f32 %v635, %v774
      %v776 = vpop.f32.mrf.mxu0
      %v777 = vadd.f32 %v631, %v776
      %v778 = vpop.f32.mrf.mxu0
      %v779 = vadd.f32 %v635, %v778
      %780 = vmatprep.mubr.bf16.mxu0 0
      %781 = vmatmul.mubr.bf16.gmra.mxu0 %v622
      %v782 = vpop.f32.mrf.mxu0
      %v783 = vadd.f32 %v631, %v782
      %v784 = vpop.f32.mrf.mxu0
      %v785 = vadd.f32 %v635, %v784
      %v786 = vpop.f32.mrf.mxu0
      %v787 = vadd.f32 %v631, %v786
      %v788 = vpop.f32.mrf.mxu0
      %v789 = vadd.f32 %v635, %v788
      %790 = vmatprep.mubr.bf16.mxu0 0
      %791 = vmatmul.mubr.bf16.gmra.mxu0 %v623
      %v792 = vpop.f32.mrf.mxu0
      %v793 = vadd.f32 %v631, %v792
      %v794 = vpop.f32.mrf.mxu0
      %v795 = vadd.f32 %v635, %v794
      %v796 = vpop.f32.mrf.mxu0
      %v797 = vadd.f32 %v631, %v796
      %v798 = vpop.f32.mrf.mxu0
      %v799 = vadd.f32 %v635, %v798
      %800 = vmatprep.mubr.bf16.mxu0 0
      %801 = vmatmul.mubr.bf16.gmra.mxu0 %v624
      %v802 = vpop.f32.mrf.mxu0
      %v803 = vadd.f32 %v631, %v802
      %v804 = vpop.f32.mrf.mxu0
      %v805 = vadd.f32 %v635, %v804
      %v806 = vpop.f32.mrf.mxu0
      %v807 = vadd.f32 %v631, %v806
      %v808 = vpop.f32.mrf.mxu0
      %v809 = vadd.f32 %v635, %v808
      %810 = vmatprep.mubr.bf16.mxu0 0
      %811 = vmatmul.mubr.bf16.gmra.mxu0 %v625
      %v812 = vpop.f32.mrf.mxu0
      %v813 = vadd.f32 %v631, %v812
      %v814 = vpop.f32.mrf.mxu0
      %v815 = vadd.f32 %v635, %v814
      %v816 = vpop.f32.mrf.mxu0
      %v817 = vadd.f32 %v631, %v816
      %v818 = vpop.f32.mrf.mxu0
      %v819 = vadd.f32 %v635, %v818
      %820 = vmatprep.mubr.bf16.mxu0 0
      %821 = vmatmul.mubr.bf16.gmra.mxu0 %v626
      %v822 = vpop.f32.mrf.mxu0
      %v823 = vadd.f32 %v631, %v822
      %v824 = vpop.f32.mrf.mxu0
      %v825 = vadd.f32 %v635, %v824
      %v826 = vpop.f32.mrf.mxu0
      %v827 = vadd.f32 %v631, %v826
      %v828 = vpop.f32.mrf.mxu0
      %v829 = vadd.f32 %v635, %v828
      %830 = vdwg.mxu0
      %v831 = vadd.f32 %v202, %v753
      %v832 = vadd.f32 %v755, 0.0
      %v833 = vadd.f32 %v203, %v757
      %v834 = vadd.f32 %v759, 0.0
      %v835 = vadd.f32 %v204, %v763
      %v836 = vadd.f32 %v765, 0.0
      %v837 = vadd.f32 %v205, %v767
      %v838 = vadd.f32 %v769, 0.0
      %v839 = vadd.f32 %v206, %v773
      %v840 = vadd.f32 %v775, 0.0
      %v841 = vadd.f32 %v207, %v777
      %v842 = vadd.f32 %v779, 0.0
      %v843 = vadd.f32 %v208, %v783
      %v844 = vadd.f32 %v785, 0.0
      %v845 = vadd.f32 %v209, %v787
      %v846 = vadd.f32 %v789, 0.0
      %v847 = vadd.f32 %v210, %v793
      %v848 = vadd.f32 %v795, 0.0
      %v849 = vadd.f32 %v211, %v797
      %v850 = vadd.f32 %v799, 0.0
      %v851 = vadd.f32 %v212, %v803
      %v852 = vadd.f32 %v805, 0.0
      %v853 = vadd.f32 %v213, %v807
      %v854 = vadd.f32 %v809, 0.0
      %v855 = vadd.f32 %v214, %v813
      %v856 = vadd.f32 %v815, 0.0
      %v857 = vadd.f32 %v215, %v817
      %v858 = vadd.f32 %v819, 0.0
      %v859 = vadd.f32 %v216, %v823
      %v860 = vadd.f32 %v825, 0.0
      %v861 = vadd.f32 %v217, %v827
      %v862 = vadd.f32 %v829, 0.0
      %v863 = vld [vmem:[%s2] sm:$0xf]
      %v864 = vld [vmem:[%s2 + $0x4] sm:$0xf]
      %v865 = vld [vmem:[%s2 + $0x8] sm:$0xf]
      %v866 = vld [vmem:[%s2 + $0xc] sm:$0xf]
      %v867 = vld [vmem:[%s2 + $0x10] sm:$0xf]
      %v868 = vld [vmem:[%s2 + $0x14] sm:$0xf]
      %v869 = vld [vmem:[%s2 + $0x18] sm:$0xf]
      %v870 = vld [vmem:[%s2 + $0x1c] sm:$0xf]
      %v871 = vld [vmem:[%s2 + $0x20] sm:$0xf]
      %v872 = vld [vmem:[%s2 + $0x24] sm:$0xf]
      %v873 = vld [vmem:[%s2 + $0x28] sm:$0xf]
      %v874 = vld [vmem:[%s2 + $0x2c] sm:$0xf]
      %v875 = vld [vmem:[%s2 + $0x30] sm:$0xf]
      %v876 = vld [vmem:[%s2 + $0x34] sm:$0xf]
      %v877 = vld [vmem:[%s2 + $0x38] sm:$0xf]
      %v878 = vld [vmem:[%s2 + $0x3c] sm:$0xf]
      %v879 = vld [vmem:[%s2 + $0x40] sm:$0xf]
      %v880 = vld [vmem:[%s2 + $0x44] sm:$0xf]
      %v881 = vld [vmem:[%s2 + $0x48] sm:$0xf]
      %v882 = vld [vmem:[%s2 + $0x4c] sm:$0xf]
      %v883 = vld [vmem:[%s2 + $0x50] sm:$0xf]
      %v884 = vld [vmem:[%s2 + $0x54] sm:$0xf]
      %v885 = vld [vmem:[%s2 + $0x58] sm:$0xf]
      %v886 = vld [vmem:[%s2 + $0x5c] sm:$0xf]
      %v887 = vld [vmem:[%s2 + $0x60] sm:$0xf]
      %v888 = vld [vmem:[%s2 + $0x64] sm:$0xf]
      %v889 = vld [vmem:[%s2 + $0x68] sm:$0xf]
      %v890 = vld [vmem:[%s2 + $0x6c] sm:$0xf]
      %v891 = vld [vmem:[%s2 + $0x70] sm:$0xf]
      %v892 = vld [vmem:[%s2 + $0x74] sm:$0xf]
      %v893 = vld [vmem:[%s2 + $0x78] sm:$0xf]
      %v894 = vld [vmem:[%s2 + $0x7c] sm:$0xf]
      %v895 = vld [vmem:[%s3 + $0x4] sm:$0x1]
      %v896 = vpack.c.bf16 %v833, %v831
      %v897 = vpack.c.bf16 %v834, %v832
      %v898 = vpack.c.bf16 %v837, %v835
      %v899 = vpack.c.bf16 %v838, %v836
      %v900 = vpack.c.bf16 %v841, %v839
      %v901 = vpack.c.bf16 %v842, %v840
      %v902 = vpack.c.bf16 %v845, %v843
      %v903 = vpack.c.bf16 %v846, %v844
      %v904 = vpack.c.bf16 %v849, %v847
      %v905 = vpack.c.bf16 %v850, %v848
      %v906 = vpack.c.bf16 %v853, %v851
      %v907 = vpack.c.bf16 %v854, %v852
      %v908 = vpack.c.bf16 %v857, %v855
      %v909 = vpack.c.bf16 %v858, %v856
      %v910 = vpack.c.bf16 %v861, %v859
      %v911 = vpack.c.bf16 %v862, %v860
      %v913 = vlaneseq
      %v914 = vshrl.u32 %v913, 7
      %v915 = vsub.s32 0, %v914
      %v916 = vrot.slane %v895, %v915
      %v950 = vunpack.c.l.b16 %v863
      %v951 = vunpack.c.l.b16 %v864
      %v952 = vunpack.c.l.b16 %v865
      %v953 = vunpack.c.l.b16 %v866
      %v954 = vunpack.c.l.b16 %v867
      %v955 = vunpack.c.l.b16 %v868
      %v956 = vunpack.c.l.b16 %v869
      %v957 = vunpack.c.l.b16 %v870
      %v958 = vunpack.c.l.b16 %v871
      %v959 = vunpack.c.l.b16 %v872
      %v960 = vunpack.c.l.b16 %v873
      %v961 = vunpack.c.l.b16 %v874
      %v962 = vunpack.c.l.b16 %v875
      %v963 = vunpack.c.l.b16 %v876
      %v964 = vunpack.c.l.b16 %v877
      %v965 = vunpack.c.l.b16 %v878
      %v966 = vunpack.c.l.b16 %v879
      %v967 = vunpack.c.l.b16 %v880
      %v968 = vunpack.c.l.b16 %v881
      %v969 = vunpack.c.l.b16 %v882
      %v970 = vunpack.c.l.b16 %v883
      %v971 = vunpack.c.l.b16 %v884
      %v972 = vunpack.c.l.b16 %v885
      %v973 = vunpack.c.l.b16 %v886
      %v974 = vunpack.c.l.b16 %v887
      %v975 = vunpack.c.l.b16 %v888
      %v976 = vunpack.c.l.b16 %v889
      %v977 = vunpack.c.l.b16 %v890
      %v978 = vunpack.c.l.b16 %v891
      %v979 = vunpack.c.l.b16 %v892
      %v980 = vunpack.c.l.b16 %v893
      %v981 = vunpack.c.l.b16 %v894
      %v982 = vpack.c.b16 %v951, %v950
      %v983 = vpack.c.b16 %v953, %v952
      %v984 = vpack.c.b16 %v955, %v954
      %v985 = vpack.c.b16 %v957, %v956
      %v986 = vpack.c.b16 %v959, %v958
      %v987 = vpack.c.b16 %v961, %v960
      %v988 = vpack.c.b16 %v963, %v962
      %v989 = vpack.c.b16 %v965, %v964
      %v990 = vpack.c.b16 %v967, %v966
      %v991 = vpack.c.b16 %v969, %v968
      %v992 = vpack.c.b16 %v971, %v970
      %v993 = vpack.c.b16 %v973, %v972
      %v994 = vpack.c.b16 %v975, %v974
      %v995 = vpack.c.b16 %v977, %v976
      %v996 = vpack.c.b16 %v979, %v978
      %v997 = vpack.c.b16 %v981, %v980
      %1014 = vmatprep.subr.bf16.mxu0 0
      %1015 = vmatpush1.bf16.msra.mxu0 %v989
      %1016 = vmatprep.subr.bf16.mxu0 0
      %1017 = vmatpush1.bf16.msra.mxu0 %v988
      %1018 = vmatprep.subr.bf16.mxu0 0
      %1019 = vmatpush1.bf16.msra.mxu0 %v987
      %1020 = vmatprep.subr.bf16.mxu0 0
      %1021 = vmatpush1.bf16.msra.mxu0 %v986
      %1022 = vmatprep.subr.bf16.mxu0 0
      %1023 = vmatpush1.bf16.msra.mxu0 %v985
      %1024 = vmatprep.subr.bf16.mxu0 0
      %1025 = vmatpush1.bf16.msra.mxu0 %v984
      %1026 = vmatprep.subr.bf16.mxu0 0
      %1027 = vmatpush1.bf16.msra.mxu0 %v983
      %1028 = vmatprep.subr.bf16.mxu0 0
      %1029 = vmatpush1.bf16.msra.mxu0 %v982
      %1030 = vmatprep.subr.bf16.mxu0 0
      %1031 = vmatpush2.bf16.msra.mxu0 %v997
      %1032 = vmatprep.subr.bf16.mxu0 0
      %1033 = vmatpush2.bf16.msra.mxu0 %v996
      %1034 = vmatprep.subr.bf16.mxu0 0
      %1035 = vmatpush2.bf16.msra.mxu0 %v995
      %1036 = vmatprep.subr.bf16.mxu0 0
      %1037 = vmatpush2.bf16.msra.mxu0 %v994
      %1038 = vmatprep.subr.bf16.mxu0 0
      %1039 = vmatpush2.bf16.msra.mxu0 %v993
      %1040 = vmatprep.subr.bf16.mxu0 0
      %1041 = vmatpush2.bf16.msra.mxu0 %v992
      %1042 = vmatprep.subr.bf16.mxu0 0
      %1043 = vmatpush2.bf16.msra.mxu0 %v991
      %1044 = vmatprep.subr.bf16.mxu0 0
      %1045 = vmatpush2.bf16.msra.mxu0 %v990
      %1046 = vmatprep.mubr.bf16.mxu0 %v897
      %1047 = vmatmul.mubr.bf16.gmra.mxu0 %v896
      %v1048 = vpop.f32.mrf.mxu0
      %v1049 = vadd.f32 %v916, %v1048
      %v1050 = vpop.f32.mrf.mxu0
      %v1051 = vpop.f32.mrf.mxu0
      %v1052 = vadd.f32 %v916, %v1051
      %v1053 = vpop.f32.mrf.mxu0
      %1054 = vmatprep.mubr.bf16.mxu0 %v899
      %1055 = vmatmul.mubr.bf16.gmra.mxu0 %v898
      %v1056 = vpop.f32.mrf.mxu0
      %v1057 = vadd.f32 %v916, %v1056
      %v1058 = vpop.f32.mrf.mxu0
      %v1059 = vpop.f32.mrf.mxu0
      %v1060 = vadd.f32 %v916, %v1059
      %v1061 = vpop.f32.mrf.mxu0
      %1062 = vmatprep.mubr.bf16.mxu0 %v901
      %1063 = vmatmul.mubr.bf16.gmra.mxu0 %v900
      %v1064 = vpop.f32.mrf.mxu0
      %v1065 = vadd.f32 %v916, %v1064
      %v1066 = vpop.f32.mrf.mxu0
      %v1067 = vpop.f32.mrf.mxu0
      %v1068 = vadd.f32 %v916, %v1067
      %v1069 = vpop.f32.mrf.mxu0
      %1070 = vmatprep.mubr.bf16.mxu0 %v903
      %1071 = vmatmul.mubr.bf16.gmra.mxu0 %v902
      %v1072 = vpop.f32.mrf.mxu0
      %v1073 = vadd.f32 %v916, %v1072
      %v1074 = vpop.f32.mrf.mxu0
      %v1075 = vpop.f32.mrf.mxu0
      %v1076 = vadd.f32 %v916, %v1075
      %v1077 = vpop.f32.mrf.mxu0
      %1078 = vmatprep.mubr.bf16.mxu0 %v905
      %1079 = vmatmul.mubr.bf16.gmra.mxu0 %v904
      %v1080 = vpop.f32.mrf.mxu0
      %v1081 = vadd.f32 %v916, %v1080
      %v1082 = vpop.f32.mrf.mxu0
      %v1083 = vpop.f32.mrf.mxu0
      %v1084 = vadd.f32 %v916, %v1083
      %v1085 = vpop.f32.mrf.mxu0
      %1086 = vmatprep.mubr.bf16.mxu0 %v907
      %1087 = vmatmul.mubr.bf16.gmra.mxu0 %v906
      %v1088 = vpop.f32.mrf.mxu0
      %v1089 = vadd.f32 %v916, %v1088
      %v1090 = vpop.f32.mrf.mxu0
      %v1091 = vpop.f32.mrf.mxu0
      %v1092 = vadd.f32 %v916, %v1091
      %v1093 = vpop.f32.mrf.mxu0
      %1094 = vmatprep.mubr.bf16.mxu0 %v909
      %1095 = vmatmul.mubr.bf16.gmra.mxu0 %v908
      %v1096 = vpop.f32.mrf.mxu0
      %v1097 = vadd.f32 %v916, %v1096
      %v1098 = vpop.f32.mrf.mxu0
      %v1099 = vpop.f32.mrf.mxu0
      %v1100 = vadd.f32 %v916, %v1099
      %v1101 = vpop.f32.mrf.mxu0
      %1102 = vmatprep.mubr.bf16.mxu0 %v911
      %1103 = vmatmul.mubr.bf16.gmra.mxu0 %v910
      %v1104 = vpop.f32.mrf.mxu0
      %v1105 = vadd.f32 %v916, %v1104
      %v1106 = vpop.f32.mrf.mxu0
      %v1107 = vpop.f32.mrf.mxu0
      %v1108 = vadd.f32 %v916, %v1107
      %v1109 = vpop.f32.mrf.mxu0
      %1110 = vdwg.mxu0
      %v1111 = vmax.f32 %v1049, 0.0
      %v1112 = vmax.f32 %v1052, 0.0
      %v1113 = vmax.f32 %v1057, 0.0
      %v1114 = vmax.f32 %v1060, 0.0
      %v1115 = vmax.f32 %v1065, 0.0
      %v1116 = vmax.f32 %v1068, 0.0
      %v1117 = vmax.f32 %v1073, 0.0
      %v1118 = vmax.f32 %v1076, 0.0
      %v1119 = vmax.f32 %v1081, 0.0
      %v1120 = vmax.f32 %v1084, 0.0
      %v1121 = vmax.f32 %v1089, 0.0
      %v1122 = vmax.f32 %v1092, 0.0
      %v1123 = vmax.f32 %v1097, 0.0
      %v1124 = vmax.f32 %v1100, 0.0
      %v1125 = vmax.f32 %v1105, 0.0
      %v1126 = vmax.f32 %v1108, 0.0
      %v1127 = vld [vmem:[%s2 + $0x80] sm:$0xf]
      %v1128 = vld [vmem:[%s2 + $0x84] sm:$0xf]
      %v1129 = vld [vmem:[%s2 + $0x88] sm:$0xf]
      %v1130 = vld [vmem:[%s2 + $0x8c] sm:$0xf]
      %v1131 = vld [vmem:[%s2 + $0x90] sm:$0xf]
      %v1132 = vld [vmem:[%s2 + $0x94] sm:$0xf]
      %v1133 = vld [vmem:[%s2 + $0x98] sm:$0xf]
      %v1134 = vld [vmem:[%s2 + $0x9c] sm:$0xf]
      %v1135 = vld [vmem:[%s2 + $0xa0] sm:$0xf]
      %v1136 = vld [vmem:[%s2 + $0xa4] sm:$0xf]
      %v1137 = vld [vmem:[%s2 + $0xa8] sm:$0xf]
      %v1138 = vld [vmem:[%s2 + $0xac] sm:$0xf]
      %v1139 = vld [vmem:[%s2 + $0xb0] sm:$0xf]
      %v1140 = vld [vmem:[%s2 + $0xb4] sm:$0xf]
      %v1141 = vld [vmem:[%s2 + $0xb8] sm:$0xf]
      %v1142 = vld [vmem:[%s2 + $0xbc] sm:$0xf]
      %v1143 = vld [vmem:[%s3 + $0x5] sm:$0x1]
      %v1144 = vpack.c.bf16 %v1112, %v1111
      %v1145 = vpack.c.bf16 %v1114, %v1113
      %v1146 = vpack.c.bf16 %v1116, %v1115
      %v1147 = vpack.c.bf16 %v1118, %v1117
      %v1148 = vpack.c.bf16 %v1120, %v1119
      %v1149 = vpack.c.bf16 %v1122, %v1121
      %v1150 = vpack.c.bf16 %v1124, %v1123
      %v1151 = vpack.c.bf16 %v1126, %v1125
      %v1153 = vlaneseq
      %v1154 = vshrl.u32 %v1153, 7
      %v1155 = vsub.s32 0, %v1154
      %v1156 = vrot.slane %v1143, %v1155
      %v1174 = vunpack.c.l.b16 %v1127
      %v1175 = vunpack.c.l.b16 %v1128
      %v1176 = vunpack.c.l.b16 %v1129
      %v1177 = vunpack.c.l.b16 %v1130
      %v1178 = vunpack.c.l.b16 %v1131
      %v1179 = vunpack.c.l.b16 %v1132
      %v1180 = vunpack.c.l.b16 %v1133
      %v1181 = vunpack.c.l.b16 %v1134
      %v1182 = vunpack.c.l.b16 %v1135
      %v1183 = vunpack.c.l.b16 %v1136
      %v1184 = vunpack.c.l.b16 %v1137
      %v1185 = vunpack.c.l.b16 %v1138
      %v1186 = vunpack.c.l.b16 %v1139
      %v1187 = vunpack.c.l.b16 %v1140
      %v1188 = vunpack.c.l.b16 %v1141
      %v1189 = vunpack.c.l.b16 %v1142
      %v1190 = vpack.c.b16 %v1175, %v1174
      %v1191 = vpack.c.b16 %v1177, %v1176
      %v1192 = vpack.c.b16 %v1179, %v1178
      %v1193 = vpack.c.b16 %v1181, %v1180
      %v1194 = vpack.c.b16 %v1183, %v1182
      %v1195 = vpack.c.b16 %v1185, %v1184
      %v1196 = vpack.c.b16 %v1187, %v1186
      %v1197 = vpack.c.b16 %v1189, %v1188
      %1206 = vmatprep.subr.bf16.mxu0 0
      %1207 = vmatpush1.bf16.msra.mxu0 %v1197
      %1208 = vmatprep.subr.bf16.mxu0 0
      %1209 = vmatpush1.bf16.msra.mxu0 %v1196
      %1210 = vmatprep.subr.bf16.mxu0 0
      %1211 = vmatpush1.bf16.msra.mxu0 %v1195
      %1212 = vmatprep.subr.bf16.mxu0 0
      %1213 = vmatpush1.bf16.msra.mxu0 %v1194
      %1214 = vmatprep.subr.bf16.mxu0 0
      %1215 = vmatpush1.bf16.msra.mxu0 %v1193
      %1216 = vmatprep.subr.bf16.mxu0 0
      %1217 = vmatpush1.bf16.msra.mxu0 %v1192
      %1218 = vmatprep.subr.bf16.mxu0 0
      %1219 = vmatpush1.bf16.msra.mxu0 %v1191
      %1220 = vmatprep.subr.bf16.mxu0 0
      %1221 = vmatpush1.bf16.msra.mxu0 %v1190
      %1222 = vmatprep.subr.bf16.mxu0 0
      %1223 = vmatpush2.bf16.msra.mxu0 0
      %1224 = vmatprep.subr.bf16.mxu0 0
      %1225 = vmatpush2.bf16.msra.mxu0 0
      %1226 = vmatprep.subr.bf16.mxu0 0
      %1227 = vmatpush2.bf16.msra.mxu0 0
      %1228 = vmatprep.subr.bf16.mxu0 0
      %1229 = vmatpush2.bf16.msra.mxu0 0
      %1230 = vmatprep.subr.bf16.mxu0 0
      %1231 = vmatpush2.bf16.msra.mxu0 0
      %1232 = vmatprep.subr.bf16.mxu0 0
      %1233 = vmatpush2.bf16.msra.mxu0 0
      %1234 = vmatprep.subr.bf16.mxu0 0
      %1235 = vmatpush2.bf16.msra.mxu0 0
      %1236 = vmatprep.subr.bf16.mxu0 0
      %1237 = vmatpush2.bf16.msra.mxu0 0
      %1238 = vmatprep.mubr.bf16.mxu0 0
      %1239 = vmatmul.mubr.bf16.gmra.mxu0 %v1144
      %v1240 = vpop.f32.mrf.mxu0
      %v1241 = vadd.f32 %v1156, %v1240
      %v1242 = vpop.f32.mrf.mxu0
      %v1243 = vpop.f32.mrf.mxu0
      %v1244 = vadd.f32 %v1156, %v1243
      %v1245 = vpop.f32.mrf.mxu0
      %1246 = vmatprep.mubr.bf16.mxu0 0
      %1247 = vmatmul.mubr.bf16.gmra.mxu0 %v1145
      %v1248 = vpop.f32.mrf.mxu0
      %v1249 = vadd.f32 %v1156, %v1248
      %v1250 = vpop.f32.mrf.mxu0
      %v1251 = vpop.f32.mrf.mxu0
      %v1252 = vadd.f32 %v1156, %v1251
      %v1253 = vpop.f32.mrf.mxu0
      %1254 = vmatprep.mubr.bf16.mxu0 0
      %1255 = vmatmul.mubr.bf16.gmra.mxu0 %v1146
      %v1256 = vpop.f32.mrf.mxu0
      %v1257 = vadd.f32 %v1156, %v1256
      %v1258 = vpop.f32.mrf.mxu0
      %v1259 = vpop.f32.mrf.mxu0
      %v1260 = vadd.f32 %v1156, %v1259
      %v1261 = vpop.f32.mrf.mxu0
      %1262 = vmatprep.mubr.bf16.mxu0 0
      %1263 = vmatmul.mubr.bf16.gmra.mxu0 %v1147
      %v1264 = vpop.f32.mrf.mxu0
      %v1265 = vadd.f32 %v1156, %v1264
      %v1266 = vpop.f32.mrf.mxu0
      %v1267 = vpop.f32.mrf.mxu0
      %v1268 = vadd.f32 %v1156, %v1267
      %v1269 = vpop.f32.mrf.mxu0
      %1270 = vmatprep.mubr.bf16.mxu0 0
      %1271 = vmatmul.mubr.bf16.gmra.mxu0 %v1148
      %v1272 = vpop.f32.mrf.mxu0
      %v1273 = vadd.f32 %v1156, %v1272
      %v1274 = vpop.f32.mrf.mxu0
      %v1275 = vpop.f32.mrf.mxu0
      %v1276 = vadd.f32 %v1156, %v1275
      %v1277 = vpop.f32.mrf.mxu0
      %1278 = vmatprep.mubr.bf16.mxu0 0
      %1279 = vmatmul.mubr.bf16.gmra.mxu0 %v1149
      %v1280 = vpop.f32.mrf.mxu0
      %v1281 = vadd.f32 %v1156, %v1280
      %v1282 = vpop.f32.mrf.mxu0
      %v1283 = vpop.f32.mrf.mxu0
      %v1284 = vadd.f32 %v1156, %v1283
      %v1285 = vpop.f32.mrf.mxu0
      %1286 = vmatprep.mubr.bf16.mxu0 0
      %1287 = vmatmul.mubr.bf16.gmra.mxu0 %v1150
      %v1288 = vpop.f32.mrf.mxu0
      %v1289 = vadd.f32 %v1156, %v1288
      %v1290 = vpop.f32.mrf.mxu0
      %v1291 = vpop.f32.mrf.mxu0
      %v1292 = vadd.f32 %v1156, %v1291
      %v1293 = vpop.f32.mrf.mxu0
      %1294 = vmatprep.mubr.bf16.mxu0 0
      %1295 = vmatmul.mubr.bf16.gmra.mxu0 %v1151
      %v1296 = vpop.f32.mrf.mxu0
      %v1297 = vadd.f32 %v1156, %v1296
      %v1298 = vpop.f32.mrf.mxu0
      %v1299 = vpop.f32.mrf.mxu0
      %v1300 = vadd.f32 %v1156, %v1299
      %v1301 = vpop.f32.mrf.mxu0
      %1302 = vdwg.mxu0
      %v1303 = vmax.f32 %v1241, 0.0
      %v1304 = vmax.f32 %v1244, 0.0
      %v1305 = vmax.f32 %v1249, 0.0
      %v1306 = vmax.f32 %v1252, 0.0
      %v1307 = vmax.f32 %v1257, 0.0
      %v1308 = vmax.f32 %v1260, 0.0
      %v1309 = vmax.f32 %v1265, 0.0
      %v1310 = vmax.f32 %v1268, 0.0
      %v1311 = vmax.f32 %v1273, 0.0
      %v1312 = vmax.f32 %v1276, 0.0
      %v1313 = vmax.f32 %v1281, 0.0
      %v1314 = vmax.f32 %v1284, 0.0
      %v1315 = vmax.f32 %v1289, 0.0
      %v1316 = vmax.f32 %v1292, 0.0
      %v1317 = vmax.f32 %v1297, 0.0
      %v1318 = vmax.f32 %v1300, 0.0
      %v1319 = vld [vmem:[%s2 + $0xc0] sm:$0xf]
      %v1320 = vld [vmem:[%s2 + $0xc4] sm:$0xf]
      %v1321 = vld [vmem:[%s2 + $0xc8] sm:$0xf]
      %v1322 = vld [vmem:[%s2 + $0xcc] sm:$0xf]
      %v1323 = vld [vmem:[%s2 + $0xd0] sm:$0xf]
      %v1324 = vld [vmem:[%s2 + $0xd4] sm:$0xf]
      %v1325 = vld [vmem:[%s2 + $0xd8] sm:$0xf]
      %v1326 = vld [vmem:[%s2 + $0xdc] sm:$0xf]
      %v1327 = vld [vmem:[%s2 + $0xe0] sm:$0xf]
      %v1328 = vld [vmem:[%s2 + $0xe4] sm:$0xf]
      %v1329 = vld [vmem:[%s2 + $0xe8] sm:$0xf]
      %v1330 = vld [vmem:[%s2 + $0xec] sm:$0xf]
      %v1331 = vld [vmem:[%s2 + $0xf0] sm:$0xf]
      %v1332 = vld [vmem:[%s2 + $0xf4] sm:$0xf]
      %v1333 = vld [vmem:[%s2 + $0xf8] sm:$0xf]
      %v1334 = vld [vmem:[%s2 + $0xfc] sm:$0xf]
      %v1335 = vld [vmem:[%s3 + $0x6] sm:$0x1]
      %v1336 = vpack.c.bf16 %v1304, %v1303
      %v1337 = vpack.c.bf16 %v1306, %v1305
      %v1338 = vpack.c.bf16 %v1308, %v1307
      %v1339 = vpack.c.bf16 %v1310, %v1309
      %v1340 = vpack.c.bf16 %v1312, %v1311
      %v1341 = vpack.c.bf16 %v1314, %v1313
      %v1342 = vpack.c.bf16 %v1316, %v1315
      %v1343 = vpack.c.bf16 %v1318, %v1317
      %v1345 = vlaneseq
      %v1346 = vshrl.u32 %v1345, 7
      %v1347 = vsub.s32 0, %v1346
      %v1348 = vrot.slane %v1335, %v1347
      %v1366 = vunpack.c.l.b16 %v1319
      %v1367 = vunpack.c.l.b16 %v1320
      %v1368 = vunpack.c.l.b16 %v1321
      %v1369 = vunpack.c.l.b16 %v1322
      %v1370 = vunpack.c.l.b16 %v1323
      %v1371 = vunpack.c.l.b16 %v1324
      %v1372 = vunpack.c.l.b16 %v1325
      %v1373 = vunpack.c.l.b16 %v1326
      %v1374 = vunpack.c.l.b16 %v1327
      %v1375 = vunpack.c.l.b16 %v1328
      %v1376 = vunpack.c.l.b16 %v1329
      %v1377 = vunpack.c.l.b16 %v1330
      %v1378 = vunpack.c.l.b16 %v1331
      %v1379 = vunpack.c.l.b16 %v1332
      %v1380 = vunpack.c.l.b16 %v1333
      %v1381 = vunpack.c.l.b16 %v1334
      %v1382 = vpack.c.b16 %v1367, %v1366
      %v1383 = vpack.c.b16 %v1369, %v1368
      %v1384 = vpack.c.b16 %v1371, %v1370
      %v1385 = vpack.c.b16 %v1373, %v1372
      %v1386 = vpack.c.b16 %v1375, %v1374
      %v1387 = vpack.c.b16 %v1377, %v1376
      %v1388 = vpack.c.b16 %v1379, %v1378
      %v1389 = vpack.c.b16 %v1381, %v1380
      %1398 = vmatprep.subr.bf16.mxu0 0
      %1399 = vmatpush1.bf16.msra.mxu0 %v1389
      %1400 = vmatprep.subr.bf16.mxu0 0
      %1401 = vmatpush1.bf16.msra.mxu0 %v1388
      %1402 = vmatprep.subr.bf16.mxu0 0
      %1403 = vmatpush1.bf16.msra.mxu0 %v1387
      %1404 = vmatprep.subr.bf16.mxu0 0
      %1405 = vmatpush1.bf16.msra.mxu0 %v1386
      %1406 = vmatprep.subr.bf16.mxu0 0
      %1407 = vmatpush1.bf16.msra.mxu0 %v1385
      %1408 = vmatprep.subr.bf16.mxu0 0
      %1409 = vmatpush1.bf16.msra.mxu0 %v1384
      %1410 = vmatprep.subr.bf16.mxu0 0
      %1411 = vmatpush1.bf16.msra.mxu0 %v1383
      %1412 = vmatprep.subr.bf16.mxu0 0
      %1413 = vmatpush1.bf16.msra.mxu0 %v1382
      %1414 = vmatprep.subr.bf16.mxu0 0
      %1415 = vmatpush2.bf16.msra.mxu0 0
      %1416 = vmatprep.subr.bf16.mxu0 0
      %1417 = vmatpush2.bf16.msra.mxu0 0
      %1418 = vmatprep.subr.bf16.mxu0 0
      %1419 = vmatpush2.bf16.msra.mxu0 0
      %1420 = vmatprep.subr.bf16.mxu0 0
      %1421 = vmatpush2.bf16.msra.mxu0 0
      %1422 = vmatprep.subr.bf16.mxu0 0
      %1423 = vmatpush2.bf16.msra.mxu0 0
      %1424 = vmatprep.subr.bf16.mxu0 0
      %1425 = vmatpush2.bf16.msra.mxu0 0
      %1426 = vmatprep.subr.bf16.mxu0 0
      %1427 = vmatpush2.bf16.msra.mxu0 0
      %1428 = vmatprep.subr.bf16.mxu0 0
      %1429 = vmatpush2.bf16.msra.mxu0 0
      %1430 = vmatprep.mubr.bf16.mxu0 0
      %1431 = vmatmul.mubr.bf16.gmra.mxu0 %v1336
      %v1432 = vpop.f32.mrf.mxu0
      %v1433 = vadd.f32 %v1348, %v1432
      %v1434 = vpop.f32.mrf.mxu0
      %v1435 = vpop.f32.mrf.mxu0
      %v1436 = vadd.f32 %v1348, %v1435
      %v1437 = vpop.f32.mrf.mxu0
      %1438 = vmatprep.mubr.bf16.mxu0 0
      %1439 = vmatmul.mubr.bf16.gmra.mxu0 %v1337
      %v1440 = vpop.f32.mrf.mxu0
      %v1441 = vadd.f32 %v1348, %v1440
      %v1442 = vpop.f32.mrf.mxu0
      %v1443 = vpop.f32.mrf.mxu0
      %v1444 = vadd.f32 %v1348, %v1443
      %v1445 = vpop.f32.mrf.mxu0
      %1446 = vmatprep.mubr.bf16.mxu0 0
      %1447 = vmatmul.mubr.bf16.gmra.mxu0 %v1338
      %v1448 = vpop.f32.mrf.mxu0
      %v1449 = vadd.f32 %v1348, %v1448
      %v1450 = vpop.f32.mrf.mxu0
      %v1451 = vpop.f32.mrf.mxu0
      %v1452 = vadd.f32 %v1348, %v1451
      %v1453 = vpop.f32.mrf.mxu0
      %1454 = vmatprep.mubr.bf16.mxu0 0
      %1455 = vmatmul.mubr.bf16.gmra.mxu0 %v1339
      %v1456 = vpop.f32.mrf.mxu0
      %v1457 = vadd.f32 %v1348, %v1456
      %v1458 = vpop.f32.mrf.mxu0
      %v1459 = vpop.f32.mrf.mxu0
      %v1460 = vadd.f32 %v1348, %v1459
      %v1461 = vpop.f32.mrf.mxu0
      %1462 = vmatprep.mubr.bf16.mxu0 0
      %1463 = vmatmul.mubr.bf16.gmra.mxu0 %v1340
      %v1464 = vpop.f32.mrf.mxu0
      %v1465 = vadd.f32 %v1348, %v1464
      %v1466 = vpop.f32.mrf.mxu0
      %v1467 = vpop.f32.mrf.mxu0
      %v1468 = vadd.f32 %v1348, %v1467
      %v1469 = vpop.f32.mrf.mxu0
      %1470 = vmatprep.mubr.bf16.mxu0 0
      %1471 = vmatmul.mubr.bf16.gmra.mxu0 %v1341
      %v1472 = vpop.f32.mrf.mxu0
      %v1473 = vadd.f32 %v1348, %v1472
      %v1474 = vpop.f32.mrf.mxu0
      %v1475 = vpop.f32.mrf.mxu0
      %v1476 = vadd.f32 %v1348, %v1475
      %v1477 = vpop.f32.mrf.mxu0
      %1478 = vmatprep.mubr.bf16.mxu0 0
      %1479 = vmatmul.mubr.bf16.gmra.mxu0 %v1342
      %v1480 = vpop.f32.mrf.mxu0
      %v1481 = vadd.f32 %v1348, %v1480
      %v1482 = vpop.f32.mrf.mxu0
      %v1483 = vpop.f32.mrf.mxu0
      %v1484 = vadd.f32 %v1348, %v1483
      %v1485 = vpop.f32.mrf.mxu0
      %1486 = vmatprep.mubr.bf16.mxu0 0
      %1487 = vmatmul.mubr.bf16.gmra.mxu0 %v1343
      %v1488 = vpop.f32.mrf.mxu0
      %v1489 = vadd.f32 %v1348, %v1488
      %v1490 = vpop.f32.mrf.mxu0
      %v1491 = vpop.f32.mrf.mxu0
      %v1492 = vadd.f32 %v1348, %v1491
      %v1493 = vpop.f32.mrf.mxu0
      %1494 = vdwg.mxu0
      %v1495 = vmax.f32 %v1433, 0.0
      %v1496 = vmax.f32 %v1436, 0.0
      %v1497 = vmax.f32 %v1441, 0.0
      %v1498 = vmax.f32 %v1444, 0.0
      %v1499 = vmax.f32 %v1449, 0.0
      %v1500 = vmax.f32 %v1452, 0.0
      %v1501 = vmax.f32 %v1457, 0.0
      %v1502 = vmax.f32 %v1460, 0.0
      %v1503 = vmax.f32 %v1465, 0.0
      %v1504 = vmax.f32 %v1468, 0.0
      %v1505 = vmax.f32 %v1473, 0.0
      %v1506 = vmax.f32 %v1476, 0.0
      %v1507 = vmax.f32 %v1481, 0.0
      %v1508 = vmax.f32 %v1484, 0.0
      %v1509 = vmax.f32 %v1489, 0.0
      %v1510 = vmax.f32 %v1492, 0.0
      %v1511 = vld [vmem:[%s2 + $0x100] sm:$0xf]
      %v1512 = vld [vmem:[%s2 + $0x104] sm:$0xf]
      %v1513 = vld [vmem:[%s2 + $0x108] sm:$0xf]
      %v1514 = vld [vmem:[%s2 + $0x10c] sm:$0xf]
      %v1515 = vld [vmem:[%s2 + $0x110] sm:$0xf]
      %v1516 = vld [vmem:[%s2 + $0x114] sm:$0xf]
      %v1517 = vld [vmem:[%s2 + $0x118] sm:$0xf]
      %v1518 = vld [vmem:[%s2 + $0x11c] sm:$0xf]
      %v1519 = vld [vmem:[%s2 + $0x120] sm:$0xf]
      %v1520 = vld [vmem:[%s2 + $0x124] sm:$0xf]
      %v1521 = vld [vmem:[%s2 + $0x128] sm:$0xf]
      %v1522 = vld [vmem:[%s2 + $0x12c] sm:$0xf]
      %v1523 = vld [vmem:[%s2 + $0x130] sm:$0xf]
      %v1524 = vld [vmem:[%s2 + $0x134] sm:$0xf]
      %v1525 = vld [vmem:[%s2 + $0x138] sm:$0xf]
      %v1526 = vld [vmem:[%s2 + $0x13c] sm:$0xf]
      %v1527 = vld [vmem:[%s3 + $0x7] sm:$0x1]
      %v1528 = vpack.c.bf16 %v1496, %v1495
      %v1529 = vpack.c.bf16 %v1498, %v1497
      %v1530 = vpack.c.bf16 %v1500, %v1499
      %v1531 = vpack.c.bf16 %v1502, %v1501
      %v1532 = vpack.c.bf16 %v1504, %v1503
      %v1533 = vpack.c.bf16 %v1506, %v1505
      %v1534 = vpack.c.bf16 %v1508, %v1507
      %v1535 = vpack.c.bf16 %v1510, %v1509
      %v1537 = vlaneseq
      %v1538 = vshrl.u32 %v1537, 7
      %v1539 = vsub.s32 0, %v1538
      %v1540 = vrot.slane %v1527, %v1539
      %v1558 = vunpack.c.l.b16 %v1511
      %v1559 = vunpack.c.l.b16 %v1512
      %v1560 = vunpack.c.l.b16 %v1513
      %v1561 = vunpack.c.l.b16 %v1514
      %v1562 = vunpack.c.l.b16 %v1515
      %v1563 = vunpack.c.l.b16 %v1516
      %v1564 = vunpack.c.l.b16 %v1517
      %v1565 = vunpack.c.l.b16 %v1518
      %v1566 = vunpack.c.l.b16 %v1519
      %v1567 = vunpack.c.l.b16 %v1520
      %v1568 = vunpack.c.l.b16 %v1521
      %v1569 = vunpack.c.l.b16 %v1522
      %v1570 = vunpack.c.l.b16 %v1523
      %v1571 = vunpack.c.l.b16 %v1524
      %v1572 = vunpack.c.l.b16 %v1525
      %v1573 = vunpack.c.l.b16 %v1526
      %v1574 = vpack.c.b16 %v1559, %v1558
      %v1575 = vpack.c.b16 %v1561, %v1560
      %v1576 = vpack.c.b16 %v1563, %v1562
      %v1577 = vpack.c.b16 %v1565, %v1564
      %v1578 = vpack.c.b16 %v1567, %v1566
      %v1579 = vpack.c.b16 %v1569, %v1568
      %v1580 = vpack.c.b16 %v1571, %v1570
      %v1581 = vpack.c.b16 %v1573, %v1572
      %1590 = vmatprep.subr.bf16.mxu0 0
      %1591 = vmatpush1.bf16.msra.mxu0 %v1581
      %1592 = vmatprep.subr.bf16.mxu0 0
      %1593 = vmatpush1.bf16.msra.mxu0 %v1580
      %1594 = vmatprep.subr.bf16.mxu0 0
      %1595 = vmatpush1.bf16.msra.mxu0 %v1579
      %1596 = vmatprep.subr.bf16.mxu0 0
      %1597 = vmatpush1.bf16.msra.mxu0 %v1578
      %1598 = vmatprep.subr.bf16.mxu0 0
      %1599 = vmatpush1.bf16.msra.mxu0 %v1577
      %1600 = vmatprep.subr.bf16.mxu0 0
      %1601 = vmatpush1.bf16.msra.mxu0 %v1576
      %1602 = vmatprep.subr.bf16.mxu0 0
      %1603 = vmatpush1.bf16.msra.mxu0 %v1575
      %1604 = vmatprep.subr.bf16.mxu0 0
      %1605 = vmatpush1.bf16.msra.mxu0 %v1574
      %1606 = vmatprep.subr.bf16.mxu0 0
      %1607 = vmatpush2.bf16.msra.mxu0 0
      %1608 = vmatprep.subr.bf16.mxu0 0
      %1609 = vmatpush2.bf16.msra.mxu0 0
      %1610 = vmatprep.subr.bf16.mxu0 0
      %1611 = vmatpush2.bf16.msra.mxu0 0
      %1612 = vmatprep.subr.bf16.mxu0 0
      %1613 = vmatpush2.bf16.msra.mxu0 0
      %1614 = vmatprep.subr.bf16.mxu0 0
      %1615 = vmatpush2.bf16.msra.mxu0 0
      %1616 = vmatprep.subr.bf16.mxu0 0
      %1617 = vmatpush2.bf16.msra.mxu0 0
      %1618 = vmatprep.subr.bf16.mxu0 0
      %1619 = vmatpush2.bf16.msra.mxu0 0
      %1620 = vmatprep.subr.bf16.mxu0 0
      %1621 = vmatpush2.bf16.msra.mxu0 0
      %1622 = vmatprep.mubr.bf16.mxu0 0
      %1623 = vmatmul.mubr.bf16.gmra.mxu0 %v1528
      %v1624 = vpop.f32.mrf.mxu0
      %v1625 = vadd.f32 %v1540, %v1624
      %v1626 = vpop.f32.mrf.mxu0
      %v1627 = vpop.f32.mrf.mxu0
      %v1628 = vadd.f32 %v1540, %v1627
      %v1629 = vpop.f32.mrf.mxu0
      %1630 = vmatprep.mubr.bf16.mxu0 0
      %1631 = vmatmul.mubr.bf16.gmra.mxu0 %v1529
      %v1632 = vpop.f32.mrf.mxu0
      %v1633 = vadd.f32 %v1540, %v1632
      %v1634 = vpop.f32.mrf.mxu0
      %v1635 = vpop.f32.mrf.mxu0
      %v1636 = vadd.f32 %v1540, %v1635
      %v1637 = vpop.f32.mrf.mxu0
      %1638 = vmatprep.mubr.bf16.mxu0 0
      %1639 = vmatmul.mubr.bf16.gmra.mxu0 %v1530
      %v1640 = vpop.f32.mrf.mxu0
      %v1641 = vadd.f32 %v1540, %v1640
      %v1642 = vpop.f32.mrf.mxu0
      %v1643 = vpop.f32.mrf.mxu0
      %v1644 = vadd.f32 %v1540, %v1643
      %v1645 = vpop.f32.mrf.mxu0
      %1646 = vmatprep.mubr.bf16.mxu0 0
      %1647 = vmatmul.mubr.bf16.gmra.mxu0 %v1531
      %v1648 = vpop.f32.mrf.mxu0
      %v1649 = vadd.f32 %v1540, %v1648
      %v1650 = vpop.f32.mrf.mxu0
      %v1651 = vpop.f32.mrf.mxu0
      %v1652 = vadd.f32 %v1540, %v1651
      %v1653 = vpop.f32.mrf.mxu0
      %1654 = vmatprep.mubr.bf16.mxu0 0
      %1655 = vmatmul.mubr.bf16.gmra.mxu0 %v1532
      %v1656 = vpop.f32.mrf.mxu0
      %v1657 = vadd.f32 %v1540, %v1656
      %v1658 = vpop.f32.mrf.mxu0
      %v1659 = vpop.f32.mrf.mxu0
      %v1660 = vadd.f32 %v1540, %v1659
      %v1661 = vpop.f32.mrf.mxu0
      %1662 = vmatprep.mubr.bf16.mxu0 0
      %1663 = vmatmul.mubr.bf16.gmra.mxu0 %v1533
      %v1664 = vpop.f32.mrf.mxu0
      %v1665 = vadd.f32 %v1540, %v1664
      %v1666 = vpop.f32.mrf.mxu0
      %v1667 = vpop.f32.mrf.mxu0
      %v1668 = vadd.f32 %v1540, %v1667
      %v1669 = vpop.f32.mrf.mxu0
      %1670 = vmatprep.mubr.bf16.mxu0 0
      %1671 = vmatmul.mubr.bf16.gmra.mxu0 %v1534
      %v1672 = vpop.f32.mrf.mxu0
      %v1673 = vadd.f32 %v1540, %v1672
      %v1674 = vpop.f32.mrf.mxu0
      %v1675 = vpop.f32.mrf.mxu0
      %v1676 = vadd.f32 %v1540, %v1675
      %v1677 = vpop.f32.mrf.mxu0
      %1678 = vmatprep.mubr.bf16.mxu0 0
      %1679 = vmatmul.mubr.bf16.gmra.mxu0 %v1535
      %v1680 = vpop.f32.mrf.mxu0
      %v1681 = vadd.f32 %v1540, %v1680
      %v1682 = vpop.f32.mrf.mxu0
      %v1683 = vpop.f32.mrf.mxu0
      %v1684 = vadd.f32 %v1540, %v1683
      %v1685 = vpop.f32.mrf.mxu0
      %1686 = vdwg.mxu0
      %v1687 = vxor.u32 %v1625, 2147483648
      %v1688 = vxor.u32 %v1628, 2147483648
      %v1689 = vxor.u32 %v1633, 2147483648
      %v1690 = vxor.u32 %v1636, 2147483648
      %v1691 = vxor.u32 %v1641, 2147483648
      %v1692 = vxor.u32 %v1644, 2147483648
      %v1693 = vxor.u32 %v1649, 2147483648
      %v1694 = vxor.u32 %v1652, 2147483648
      %v1695 = vxor.u32 %v1657, 2147483648
      %v1696 = vxor.u32 %v1660, 2147483648
      %v1697 = vxor.u32 %v1665, 2147483648
      %v1698 = vxor.u32 %v1668, 2147483648
      %v1699 = vxor.u32 %v1673, 2147483648
      %v1700 = vxor.u32 %v1676, 2147483648
      %v1701 = vxor.u32 %v1681, 2147483648
      %v1702 = vxor.u32 %v1684, 2147483648
      %v1703 = vmul.f32 %v1687, 1.442695
      %v1704 = vpow.pop %v1703
      %v1705 = vmul.f32 %v1688, 1.442695
      %v1706 = vpow.pop %v1705
      %v1707 = vmul.f32 %v1689, 1.442695
      %v1708 = vpow.pop %v1707
      %v1709 = vmul.f32 %v1690, 1.442695
      %v1710 = vpow.pop %v1709
      %v1711 = vmul.f32 %v1691, 1.442695
      %v1712 = vpow.pop %v1711
      %v1713 = vmul.f32 %v1692, 1.442695
      %v1714 = vpow.pop %v1713
      %v1715 = vmul.f32 %v1693, 1.442695
      %v1716 = vpow.pop %v1715
      %v1717 = vmul.f32 %v1694, 1.442695
      %v1718 = vpow.pop %v1717
      %v1719 = vmul.f32 %v1695, 1.442695
      %v1720 = vpow.pop %v1719
      %v1721 = vmul.f32 %v1696, 1.442695
      %v1722 = vpow.pop %v1721
      %v1723 = vmul.f32 %v1697, 1.442695
      %v1724 = vpow.pop %v1723
      %v1725 = vmul.f32 %v1698, 1.442695
      %v1726 = vpow.pop %v1725
      %v1727 = vmul.f32 %v1699, 1.442695
      %v1728 = vpow.pop %v1727
      %v1729 = vmul.f32 %v1700, 1.442695
      %v1730 = vpow.pop %v1729
      %v1731 = vmul.f32 %v1701, 1.442695
      %v1732 = vpow.pop %v1731
      %v1733 = vmul.f32 %v1702, 1.442695
      %v1734 = vpow.pop %v1733
      %v1735 = vadd.f32 %v1704, 1.0
      %v1736 = vadd.f32 %v1706, 1.0
      %v1737 = vadd.f32 %v1708, 1.0
      %v1738 = vadd.f32 %v1710, 1.0
      %v1739 = vadd.f32 %v1712, 1.0
      %v1740 = vadd.f32 %v1714, 1.0
      %v1741 = vadd.f32 %v1716, 1.0
      %v1742 = vadd.f32 %v1718, 1.0
      %v1743 = vadd.f32 %v1720, 1.0
      %v1744 = vadd.f32 %v1722, 1.0
      %v1745 = vadd.f32 %v1724, 1.0
      %v1746 = vadd.f32 %v1726, 1.0
      %v1747 = vadd.f32 %v1728, 1.0
      %v1748 = vadd.f32 %v1730, 1.0
      %v1749 = vadd.f32 %v1732, 1.0
      %v1750 = vadd.f32 %v1734, 1.0
      %v1751 = vrcp.pop %v1735
      %v1752 = vmul.f32 1.0, %v1751
      %v1753 = vrcp.pop %v1736
      %v1754 = vmul.f32 1.0, %v1753
      %v1755 = vrcp.pop %v1737
      %v1756 = vmul.f32 1.0, %v1755
      %v1757 = vrcp.pop %v1738
      %v1758 = vmul.f32 1.0, %v1757
      %v1759 = vrcp.pop %v1739
      %v1760 = vmul.f32 1.0, %v1759
      %v1761 = vrcp.pop %v1740
      %v1762 = vmul.f32 1.0, %v1761
      %v1763 = vrcp.pop %v1741
      %v1764 = vmul.f32 1.0, %v1763
      %v1765 = vrcp.pop %v1742
      %v1766 = vmul.f32 1.0, %v1765
      %v1767 = vrcp.pop %v1743
      %v1768 = vmul.f32 1.0, %v1767
      %v1769 = vrcp.pop %v1744
      %v1770 = vmul.f32 1.0, %v1769
      %v1771 = vrcp.pop %v1745
      %v1772 = vmul.f32 1.0, %v1771
      %v1773 = vrcp.pop %v1746
      %v1774 = vmul.f32 1.0, %v1773
      %v1775 = vrcp.pop %v1747
      %v1776 = vmul.f32 1.0, %v1775
      %v1777 = vrcp.pop %v1748
      %v1778 = vmul.f32 1.0, %v1777
      %v1779 = vrcp.pop %v1749
      %v1780 = vmul.f32 1.0, %v1779
      %v1781 = vrcp.pop %v1750
      %v1782 = vmul.f32 1.0, %v1781
      %1783 = vst [vmem:[%s199] sm:$0xff] %v1752
      %1784 = vst [vmem:[%s199 + $0x8] sm:$0xff] %v1754
      %1785 = vst [vmem:[%s199 + $0x10] sm:$0xff] %v1756
      %1786 = vst [vmem:[%s199 + $0x18] sm:$0xff] %v1758
      %1787 = vst [vmem:[%s199 + $0x20] sm:$0xff] %v1760
      %1788 = vst [vmem:[%s199 + $0x28] sm:$0xff] %v1762
      %1789 = vst [vmem:[%s199 + $0x30] sm:$0xff] %v1764
      %1790 = vst [vmem:[%s199 + $0x38] sm:$0xff] %v1766
      %1791 = vst [vmem:[%s199 + $0x40] sm:$0xff] %v1768
      %1792 = vst [vmem:[%s199 + $0x48] sm:$0xff] %v1770
      %1793 = vst [vmem:[%s199 + $0x50] sm:$0xff] %v1772
      %1794 = vst [vmem:[%s199 + $0x58] sm:$0xff] %v1774
      %1795 = vst [vmem:[%s199 + $0x60] sm:$0xff] %v1776
      %1796 = vst [vmem:[%s199 + $0x68] sm:$0xff] %v1778
      %1797 = vst [vmem:[%s199 + $0x70] sm:$0xff] %v1780
      %1798 = vst [vmem:[%s199 + $0x78] sm:$0xff] %v1782
      %s1799 = smul.u32 16, %s15
      %p1800 = scmp.lt.s32.totalorder %s1799, 31
      %s1801 = scalar_select %p1800, %s1799, 31
      %s1802 = smul.addr %s1801, 8
      %s1803 = scalar_lea.vmem %s4, %s1802
      // Predicated region
      $region37: #{autoencoder_forward_batched.1} parent=35 // pred_check
        %p1804 = pneg %p122
      $region38: #{autoencoder_forward_batched.1} parent=35 // pred_check_branch
        %1806 = sbr.rel (%p1804) target = $region40
      $region39: #{autoencoder_forward_batched.1} parent=35 // pred_region
        %s1807 = smul.u32 16, %s15
      $region40: #{autoencoder_forward_batched.1} parent=35 // pred_fallthru
        _
    $region36: #{autoencoder_forward_batched.1} parent=5 // pred_fallthru
      _
    %p1808 = scmp.le.s32.totalorder 2, %s10
    // Predicated region
    $region41: #{autoencoder_forward_batched.1} parent=5 // pred_check
      %p1809 = pneg %p1808
    $region42: #{autoencoder_forward_batched.1} parent=5 // pred_check_branch
      %1811 = sbr.rel (%p1809) target = $region44
    $region43: #{autoencoder_forward_batched.1} parent=5 // pred_region
      %s1812 = ssub.s32 %s10, 2
      // Predicated region
      $region45: #{autoencoder_forward_batched.1} parent=43 // pred_check
        %p1813 = pneg %p128
      $region46: #{autoencoder_forward_batched.1} parent=43 // pred_check_branch
        %1815 = sbr.rel (%p1813) target = $region48
      $region47: #{autoencoder_forward_batched.1} parent=43 // pred_region
        %s1816 = smul.u32 16, %s16
        %p1817 = scmp.lt.s32.totalorder %s1816, 31
        %s1818 = scalar_select %p1817, %s1816, 31
        %s1819 = smul.addr %s1818, 8
        %s1820 = scalar_lea.vmem %s4, %s1819
      $region48: #{autoencoder_forward_batched.1} parent=43 // pred_fallthru
        _
    $region44: #{autoencoder_forward_batched.1} parent=5 // pred_fallthru
      _
  $region6: #{autoencoder_forward_batched.1} parent=0 // loop_footer
    %s14 = sadd.s32 1, %s10
  $region7: #{autoencoder_forward_batched.1} parent=0 // loop_footer_branch
    %9 = sbr.rel target = $region3
  $region8: #{autoencoder_forward_batched.1} parent=0 // loop_exit
    _

</llo_original>
